<compile_context>
chip_gen: v7x
topology: tpu7x:2x2x1
jax: 0.10.0
libtpu: 0.0.40
codegen_flags: <defaults>
</compile_context>

<pallas_src>
import functools
import math

import jax
import jax.numpy as jnp
import numpy as np
from jax.experimental import pallas as pl
from jax.experimental.pallas import tpu as pltpu


def _round8(n):
    return ((n + 7) // 8) * 8


# ----------------------------------------------------------------------------
# Parameter slab packing (one contiguous f32 (rows, 128) array, 8-row aligned)
# ----------------------------------------------------------------------------
def pack_param_slab(named_tensors):
    layout = {}
    row = 0
    for name, arr in named_tensors:
        din, dout = arr.shape
        assert dout <= 128, f"{name}: dout {dout} exceeds lane width"
        layout[name] = (row, din, dout)
        row += _round8(din)
    slab = np.zeros((row, 128), np.float32)
    for name, arr in named_tensors:
        r, din, dout = layout[name]
        slab[r:r + din, :dout] = np.asarray(arr, np.float32)
    return jnp.asarray(slab), layout


def prepare_params(params):
    (W1, b1, W2, b2, Wt1, bt1, Wt2, bt2,
     Wc1, bc1, Wc2, bc2, Wc3, bc3, Wc4, bc4, Wc5, bc5, Wc6, bc6,
     Ww1, bw1, Ww2, bw2, Ww3, bw3, Ww4, bw4, Ww5, bw5) = params["flat"]
    named = [
        # fused first layer (shared input z): pre_agg L1 || time_prob L1
        ("Wz", jnp.concatenate([W1, Ww1], axis=1)),
        ("bz", jnp.concatenate([b1, bw1], axis=1)),
        ("W2", W2), ("b2", b2),
        ("Ww2", Ww2), ("bw2", bw2),
        ("Ww3", Ww3), ("bw3", bw3),
        ("Ww4", Ww4), ("bw4", bw4),
        ("Ww5", Ww5), ("bw5", bw5),
        # fused agg layer (shared input agg_z): cycle L1 || trend L1
        ("Wagg", jnp.concatenate([Wc1, Wt1], axis=1)),
        ("bagg", jnp.concatenate([bc1, bt1], axis=1)),
        ("Wc2", Wc2), ("bc2", bc2),
        ("Wc3", Wc3), ("bc3", bc3),
        ("Wc4", Wc4), ("bc4", bc4),
        ("Wc5", Wc5), ("bc5", bc5),
        ("Wc6", Wc6), ("bc6", bc6),
        ("Wt2", Wt2), ("bt2", bt2),
    ]
    slab, layout = pack_param_slab(named)
    slopes = params["prelu"].reshape(-1).astype(jnp.float32)  # (12,) -> SMEM
    return slab, layout, slopes


# ----------------------------------------------------------------------------
# Kernel
# ----------------------------------------------------------------------------
def maskgen_kernel(T, Bp, max_len, layout,
                   # inputs
                   z_ref,        # (T*Bp, d_z)  VMEM, t-major rows
                   times_ref,    # (Bp, T)      VMEM
                   slopes_ref,   # (12,)        SMEM  (PReLU slopes)
                   slab_ref,     # (rows, 128)  VMEM  (all weights/biases)
                   # outputs
                   out_bt_ref,   # (Bp, T+4)    [pc_re | alpha | beta | thresh | p]
                   out_pt_ref):  # (T*Bp, 1)    p_time (sigmoid probs, t-major)
    dot = functools.partial(jnp.dot, preferred_element_type=jnp.float32)

    def tensor(name):
        r, din, dout = layout[name]
        return slab_ref[r:r + din, 0:dout]          # static, 8-row-aligned slice

    def prelu(x, k):
        s = slopes_ref[k]                            # scalar read from SMEM
        return jnp.where(x > 0, x, s * x)

    d_pre = layout["W2"][1]      # 32
    d_time = layout["Ww2"][1]    # 64
    d_cyc = layout["Wc2"][1]     # 64
    d_trend = layout["Wt2"][1]   # 32

    z = z_ref[...]                                               # (T*Bp, d_z)

    # ---- fused first layer: z @ [W1 | Ww1] ----------------------------------
    zz = dot(z, tensor("Wz")) + tensor("bz")                     # (T*Bp, 96)
    h = prelu(zz[:, 0:d_pre], 0)                                 # pre_agg L1
    t = prelu(zz[:, d_pre:d_pre + d_time], 2)                    # time_prob L1

    # ---- pre_agg L2 ----------------------------------------------------------
    h = prelu(dot(h, tensor("W2")) + tensor("b2"), 1)            # (T*Bp, 32)

    # ---- time_prob L2..L4 + sigmoid head ------------------------------------
    t = prelu(dot(t, tensor("Ww2")) + tensor("bw2"), 3)
    t = prelu(dot(t, tensor("Ww3")) + tensor("bw3"), 4)
    t = prelu(dot(t, tensor("Ww4")) + tensor("bw4"), 5)
    p_time = jax.nn.sigmoid(dot(t, tensor("Ww5")) + tensor("bw5"))   # (T*Bp, 1)
    out_pt_ref[...] = p_time

    # ---- agg_z = max over time (tree reduction on aligned Bp-row blocks) ----
    cur, n = h, T
    while n > 1 and n % 2 == 0:                      # log2-depth halving
        half = n // 2
        cur = jnp.maximum(cur[0:half * Bp, :], cur[half * Bp:n * Bp, :])
        n = half
    agg = cur[0:Bp, :]
    for tt in range(1, n):                           # leftover (only if T not pow2)
        agg = jnp.maximum(agg, cur[tt * Bp:(tt + 1) * Bp, :])    # (Bp, 32)

    # ---- fused agg layer: agg @ [Wc1 | Wt1] ----------------------------------
    aa = dot(agg, tensor("Wagg")) + tensor("bagg")               # (Bp, 96)
    c = prelu(aa[:, 0:d_cyc], 6)                                 # cycle L1
    tr = prelu(aa[:, d_cyc:d_cyc + d_trend], 11)                 # trend L1

    # ---- cycle_net L2..L5 + head ---------------------------------------------
    c = prelu(dot(c, tensor("Wc2")) + tensor("bc2"), 7)
    c = prelu(dot(c, tensor("Wc3")) + tensor("bc3"), 8)
    c = prelu(dot(c, tensor("Wc4")) + tensor("bc4"), 9)
    c = prelu(dot(c, tensor("Wc5")) + tensor("bc5"), 10)
    c = dot(c, tensor("Wc6")) + tensor("bc6")                    # (Bp, 3)

    alpha = jnp.maximum(c[:, 0:1], 0.0) + 2.0 * math.pi / max_len   # (Bp, 1)
    beta = jnp.tanh(c[:, 1:2]) * math.pi                            # (Bp, 1)
    thresh = jnp.tanh(c[:, 2:3])                                    # (Bp, 1)

    # ---- trend head ----------------------------------------------------------
    p = jax.nn.sigmoid(dot(tr, tensor("Wt2")) + tensor("bt2")) * max_len  # (Bp,1)

    # ---- sine-curve mask + eval-mode hard threshold --------------------------
    tm = times_ref[...]                                             # (Bp, T)
    p_cycle = (jnp.sin(alpha * tm + beta) - thresh) * 0.25 + 0.5    # (Bp, T)
    pc_re = (p_cycle > 0.5).astype(jnp.float32)

    out_bt_ref[...] = jnp.concatenate([pc_re, alpha, beta, thresh, p], axis=1)


# ----------------------------------------------------------------------------
# Wrapper
# ----------------------------------------------------------------------------
def mask_gen_stochastic(params, z_seq, src, times, *, max_len):
    T, B, d_z = z_seq.shape
    Bp = _round8(B)

    slab, layout, slopes = prepare_params(params)

    # glue (plain XLA): pad batch to sublane multiple, flatten t-major, transpose times
    z_p = jnp.pad(z_seq, ((0, 0), (0, Bp - B), (0, 0)))
    z2d = z_p.reshape(T * Bp, d_z)
    times_bt = jnp.pad(jnp.transpose(times, (1, 0)), ((0, Bp - B), (0, 0)))  # (Bp, T)

    kern = functools.partial(maskgen_kernel, T, Bp, float(max_len), layout)
    vmem = pl.BlockSpec(memory_space=pltpu.MemorySpace.VMEM)
    smem = pl.BlockSpec(memory_space=pltpu.MemorySpace.SMEM)

    out_bt, out_pt = pl.pallas_call(
        kern,
        out_shape=(jax.ShapeDtypeStruct((Bp, T + 4), jnp.float32),
                   jax.ShapeDtypeStruct((T * Bp, 1), jnp.float32)),
        in_specs=[vmem, vmem, smem, vmem],
        out_specs=(vmem, vmem),
    )(z2d, times_bt, slopes, slab)

    # wrapper-side relayout (recommended: keep the kernel free of (T,B)->(B,T) concat)
    p_time_bt = out_pt.reshape(T, Bp, 1)[:, :B, :].transpose(1, 0, 2)   # (B, T, 1)
    total_mask = p_time_bt
    pc_re = out_bt[:B, :T]
    pt_re = (p_time_bt[..., 0] > 0.5).astype(jnp.float32)
    total_mask_reparameterize = pc_re * pt_re                            # (B, T)
    alpha = out_bt[:B, T:T + 1]
    beta = out_bt[:B, T + 1:T + 2]
    thresh = out_bt[:B, T + 2:T + 3]
    p = out_bt[:B, T + 3:T + 4]

    smooth_src = src   # TODO(synk): external `smoother` undefined in the module
    return smooth_src, total_mask, total_mask_reparameterize, (alpha, beta, thresh, p)


# ----------------------------------------------------------------------------
# Deterministic parameter init (PyTorch Linear-like uniform(-1/sqrt(in), +))
# Weights stored as (in, out); biases as (1, out).
# ----------------------------------------------------------------------------
def init_params(key, d_z, pre=32, trend=32, cyc=64, timed=64):
    dims = [
        (d_z, pre), (pre, pre),                                                   # pre_agg_net
        (pre, trend), (trend, 1),                                                 # trend_net
        (pre, cyc), (cyc, cyc), (cyc, cyc), (cyc, cyc), (cyc, cyc), (cyc, 3),     # cycle_net
        (d_z, timed), (timed, timed), (timed, timed), (timed, timed), (timed, 1), # time_prob_net
    ]
    flat = []
    for din, dout in dims:
        key, k1, k2 = jax.random.split(key, 3)
        bound = 1.0 / math.sqrt(din)
        flat.append(jax.random.uniform(k1, (din, dout), jnp.float32, -bound, bound))
        flat.append(jax.random.uniform(k2, (1, dout), jnp.float32, -bound, bound))
    prelu = jnp.full((1, 12), 0.25, jnp.float32)     # nn.PReLU() default init
    return {"flat": flat, "prelu": prelu}


# ----------------------------------------------------------------------------
# Pure-JAX reference (continuous outputs only)
# ----------------------------------------------------------------------------
def reference(params, z_seq, times, max_len):
    (W1, b1, W2, b2, Wt1, bt1, Wt2, bt2,
     Wc1, bc1, Wc2, bc2, Wc3, bc3, Wc4, bc4, Wc5, bc5, Wc6, bc6,
     Ww1, bw1, Ww2, bw2, Ww3, bw3, Ww4, bw4, Ww5, bw5) = params["flat"]
    a = params["prelu"]
    pr = lambda x, k: jnp.where(x > 0, x, a[0, k] * x)

    h = pr(z_seq @ W1 + b1, 0)
    h = pr(h @ W2 + b2, 1)
    t = pr(z_seq @ Ww1 + bw1, 2)
    t = pr(t @ Ww2 + bw2, 3)
    t = pr(t @ Ww3 + bw3, 4)
    t = pr(t @ Ww4 + bw4, 5)
    p_time = jax.nn.sigmoid(t @ Ww5 + bw5)                     # (T,B,1)
    agg = h.max(axis=0)                                        # (B,32)
    c = pr(agg @ Wc1 + bc1, 6)
    c = pr(c @ Wc2 + bc2, 7)
    c = pr(c @ Wc3 + bc3, 8)
    c = pr(c @ Wc4 + bc4, 9)
    c = pr(c @ Wc5 + bc5, 10)
    c = c @ Wc6 + bc6
    alpha = jnp.maximum(c[..., 0:1], 0.0) + 2 * math.pi / max_len
    beta = jnp.tanh(c[..., 1:2]) * math.pi
    thresh = jnp.tanh(c[..., 2:3])
    p = jax.nn.sigmoid(pr(agg @ Wt1 + bt1, 11) @ Wt2 + bt2) * max_len
    total_mask = jnp.transpose(p_time, (1, 0, 2))              # (B,T,1)
    return total_mask, alpha, beta, thresh, p


# ----------------------------------------------------------------------------
if __name__ == "__main__":
    T, B, d_z = 8, 2, 16
    max_len = T

    key = jax.random.PRNGKey(0)
    kz, ks, kp = jax.random.split(key, 3)
    z_seq = jax.random.normal(kz, (T, B, d_z), jnp.float32)
    src = jax.random.normal(ks, (T, B), jnp.float32)
    times = jnp.tile(jnp.arange(T, dtype=jnp.float32)[:, None], (1, B))  # (T, B)

    params = init_params(kp, d_z)

    outs = mask_gen_stochastic(params, z_seq, src, times, max_len=max_len)
    smooth_src, total_mask, tm_rep, (alpha, beta, thresh, p) = jax.block_until_ready(outs)

    # sanity check (continuous outputs; binary mask thresholding excluded to avoid
    # equality-boundary flakiness)
    ref_tm, ref_a, ref_b, ref_th, ref_p = reference(params, z_seq, times, max_len)
    np.testing.assert_allclose(np.asarray(total_mask), np.asarray(ref_tm), atol=1e-3, rtol=1e-3)
    np.testing.assert_allclose(np.asarray(alpha), np.asarray(ref_a), atol=1e-3, rtol=1e-3)
    np.testing.assert_allclose(np.asarray(beta), np.asarray(ref_b), atol=1e-3, rtol=1e-3)
    np.testing.assert_allclose(np.asarray(thresh), np.asarray(ref_th), atol=1e-3, rtol=1e-3)
    np.testing.assert_allclose(np.asarray(p), np.asarray(ref_p), atol=1e-3, rtol=1e-3)

    assert smooth_src.shape == (T, B)
    assert total_mask.shape == (B, T, 1)
    assert tm_rep.shape == (B, T)

    print("KERNEL_OK")
</pallas_src>

<mosaic_0001>
module attributes {stable_mosaic.version = 11 : i64} {
  func.func @maskgen_kernel(%arg0: memref<64x16xf32, #tpu.memory_space<vmem>>, %arg1: memref<8x8xf32, #tpu.memory_space<vmem>>, %arg2: memref<12xf32, #tpu.memory_space<smem>>, %arg3: memref<792x128xf32, #tpu.memory_space<vmem>>, %arg4: memref<8x12xf32, #tpu.memory_space<vmem>>, %arg5: memref<64x1xf32, #tpu.memory_space<vmem>>) attributes {dimension_semantics = [], scalar_prefetch = 0 : i64, scratch_operands = 0 : i64, tpu.core_type = #tpu.core_type<tc>} {
    %c0 = arith.constant 0 : index
    %c0_0 = arith.constant 0 : index
    %0 = vector.load %arg0[%c0, %c0_0] : memref<64x16xf32, #tpu.memory_space<vmem>>, vector<64x16xf32>
    %c0_1 = arith.constant 0 : index
    %c0_2 = arith.constant 0 : index
    %1 = vector.load %arg3[%c0_1, %c0_2] : memref<792x128xf32, #tpu.memory_space<vmem>>, vector<16x96xf32>
    %cst = arith.constant dense<0.000000e+00> : vector<64x96xf32>
    %2 = tpu.matmul %0, %1, %cst {dimension_numbers = #tpu.dot_dimension_numbers<[1], [0], [0], [1], [0, 0, 1, 1], [], []>} : vector<64x16xf32>, vector<16x96xf32>, vector<64x96xf32> -> vector<64x96xf32>
    %c16 = arith.constant 16 : index
    %c0_3 = arith.constant 0 : index
    %3 = vector.load %arg3[%c16, %c0_3] : memref<792x128xf32, #tpu.memory_space<vmem>>, vector<1x96xf32>
    %4 = vector.broadcast %3 : vector<1x96xf32> to vector<64x96xf32>
    %5 = arith.addf %2, %4 : vector<64x96xf32>
    %6 = vector.extract_strided_slice %5 {offsets = [0, 0], sizes = [64, 32], strides = [1, 1]} : vector<64x96xf32> to vector<64x32xf32>
    %c0_4 = arith.constant 0 : index
    %7 = memref.load %arg2[%c0_4] : memref<12xf32, #tpu.memory_space<smem>>
    %cst_5 = arith.constant 0.000000e+00 : f32
    %8 = vector.broadcast %cst_5 : f32 to vector<64x32xf32>
    %9 = arith.cmpf ogt, %6, %8 : vector<64x32xf32>
    %10 = vector.broadcast %7 : f32 to vector<64x32xf32>
    %11 = arith.mulf %10, %6 : vector<64x32xf32>
    %12 = arith.select %9, %6, %11 : vector<64x32xi1>, vector<64x32xf32>
    %13 = vector.extract_strided_slice %5 {offsets = [0, 32], sizes = [64, 64], strides = [1, 1]} : vector<64x96xf32> to vector<64x64xf32>
    %c2 = arith.constant 2 : index
    %14 = memref.load %arg2[%c2] : memref<12xf32, #tpu.memory_space<smem>>
    %cst_6 = arith.constant 0.000000e+00 : f32
    %15 = vector.broadcast %cst_6 : f32 to vector<64x64xf32>
    %16 = arith.cmpf ogt, %13, %15 : vector<64x64xf32>
    %17 = vector.broadcast %14 : f32 to vector<64x64xf32>
    %18 = arith.mulf %17, %13 : vector<64x64xf32>
    %19 = arith.select %16, %13, %18 : vector<64x64xi1>, vector<64x64xf32>
    %c24 = arith.constant 24 : index
    %c0_7 = arith.constant 0 : index
    %20 = vector.load %arg3[%c24, %c0_7] : memref<792x128xf32, #tpu.memory_space<vmem>>, vector<32x32xf32>
    %cst_8 = arith.constant dense<0.000000e+00> : vector<64x32xf32>
    %21 = tpu.matmul %12, %20, %cst_8 {dimension_numbers = #tpu.dot_dimension_numbers<[1], [0], [0], [1], [0, 0, 1, 1], [], []>} : vector<64x32xf32>, vector<32x32xf32>, vector<64x32xf32> -> vector<64x32xf32>
    %c56 = arith.constant 56 : index
    %c0_9 = arith.constant 0 : index
    %22 = vector.load %arg3[%c56, %c0_9] : memref<792x128xf32, #tpu.memory_space<vmem>>, vector<1x32xf32>
    %23 = vector.broadcast %22 : vector<1x32xf32> to vector<64x32xf32>
    %24 = arith.addf %21, %23 : vector<64x32xf32>
    %c1 = arith.constant 1 : index
    %25 = memref.load %arg2[%c1] : memref<12xf32, #tpu.memory_space<smem>>
    %cst_10 = arith.constant 0.000000e+00 : f32
    %26 = vector.broadcast %cst_10 : f32 to vector<64x32xf32>
    %27 = arith.cmpf ogt, %24, %26 : vector<64x32xf32>
    %28 = vector.broadcast %25 : f32 to vector<64x32xf32>
    %29 = arith.mulf %28, %24 : vector<64x32xf32>
    %30 = arith.select %27, %24, %29 : vector<64x32xi1>, vector<64x32xf32>
    %c64 = arith.constant 64 : index
    %c0_11 = arith.constant 0 : index
    %31 = vector.load %arg3[%c64, %c0_11] : memref<792x128xf32, #tpu.memory_space<vmem>>, vector<64x64xf32>
    %cst_12 = arith.constant dense<0.000000e+00> : vector<64x64xf32>
    %32 = tpu.matmul %19, %31, %cst_12 {dimension_numbers = #tpu.dot_dimension_numbers<[1], [0], [0], [1], [0, 0, 1, 1], [], []>} : vector<64x64xf32>, vector<64x64xf32>, vector<64x64xf32> -> vector<64x64xf32>
    %c128 = arith.constant 128 : index
    %c0_13 = arith.constant 0 : index
    %33 = vector.load %arg3[%c128, %c0_13] : memref<792x128xf32, #tpu.memory_space<vmem>>, vector<1x64xf32>
    %34 = vector.broadcast %33 : vector<1x64xf32> to vector<64x64xf32>
    %35 = arith.addf %32, %34 : vector<64x64xf32>
    %c3 = arith.constant 3 : index
    %36 = memref.load %arg2[%c3] : memref<12xf32, #tpu.memory_space<smem>>
    %cst_14 = arith.constant 0.000000e+00 : f32
    %37 = vector.broadcast %cst_14 : f32 to vector<64x64xf32>
    %38 = arith.cmpf ogt, %35, %37 : vector<64x64xf32>
    %39 = vector.broadcast %36 : f32 to vector<64x64xf32>
    %40 = arith.mulf %39, %35 : vector<64x64xf32>
    %41 = arith.select %38, %35, %40 : vector<64x64xi1>, vector<64x64xf32>
    %c136 = arith.constant 136 : index
    %c0_15 = arith.constant 0 : index
    %42 = vector.load %arg3[%c136, %c0_15] : memref<792x128xf32, #tpu.memory_space<vmem>>, vector<64x64xf32>
    %cst_16 = arith.constant dense<0.000000e+00> : vector<64x64xf32>
    %43 = tpu.matmul %41, %42, %cst_16 {dimension_numbers = #tpu.dot_dimension_numbers<[1], [0], [0], [1], [0, 0, 1, 1], [], []>} : vector<64x64xf32>, vector<64x64xf32>, vector<64x64xf32> -> vector<64x64xf32>
    %c200 = arith.constant 200 : index
    %c0_17 = arith.constant 0 : index
    %44 = vector.load %arg3[%c200, %c0_17] : memref<792x128xf32, #tpu.memory_space<vmem>>, vector<1x64xf32>
    %45 = vector.broadcast %44 : vector<1x64xf32> to vector<64x64xf32>
    %46 = arith.addf %43, %45 : vector<64x64xf32>
    %c4 = arith.constant 4 : index
    %47 = memref.load %arg2[%c4] : memref<12xf32, #tpu.memory_space<smem>>
    %cst_18 = arith.constant 0.000000e+00 : f32
    %48 = vector.broadcast %cst_18 : f32 to vector<64x64xf32>
    %49 = arith.cmpf ogt, %46, %48 : vector<64x64xf32>
    %50 = vector.broadcast %47 : f32 to vector<64x64xf32>
    %51 = arith.mulf %50, %46 : vector<64x64xf32>
    %52 = arith.select %49, %46, %51 : vector<64x64xi1>, vector<64x64xf32>
    %c208 = arith.constant 208 : index
    %c0_19 = arith.constant 0 : index
    %53 = vector.load %arg3[%c208, %c0_19] : memref<792x128xf32, #tpu.memory_space<vmem>>, vector<64x64xf32>
    %cst_20 = arith.constant dense<0.000000e+00> : vector<64x64xf32>
    %54 = tpu.matmul %52, %53, %cst_20 {dimension_numbers = #tpu.dot_dimension_numbers<[1], [0], [0], [1], [0, 0, 1, 1], [], []>} : vector<64x64xf32>, vector<64x64xf32>, vector<64x64xf32> -> vector<64x64xf32>
    %c272 = arith.constant 272 : index
    %c0_21 = arith.constant 0 : index
    %55 = vector.load %arg3[%c272, %c0_21] : memref<792x128xf32, #tpu.memory_space<vmem>>, vector<1x64xf32>
    %56 = vector.broadcast %55 : vector<1x64xf32> to vector<64x64xf32>
    %57 = arith.addf %54, %56 : vector<64x64xf32>
    %c5 = arith.constant 5 : index
    %58 = memref.load %arg2[%c5] : memref<12xf32, #tpu.memory_space<smem>>
    %cst_22 = arith.constant 0.000000e+00 : f32
    %59 = vector.broadcast %cst_22 : f32 to vector<64x64xf32>
    %60 = arith.cmpf ogt, %57, %59 : vector<64x64xf32>
    %61 = vector.broadcast %58 : f32 to vector<64x64xf32>
    %62 = arith.mulf %61, %57 : vector<64x64xf32>
    %63 = arith.select %60, %57, %62 : vector<64x64xi1>, vector<64x64xf32>
    %c280 = arith.constant 280 : index
    %c0_23 = arith.constant 0 : index
    %64 = vector.load %arg3[%c280, %c0_23] : memref<792x128xf32, #tpu.memory_space<vmem>>, vector<64x1xf32>
    %cst_24 = arith.constant dense<0.000000e+00> : vector<64x1xf32>
    %65 = tpu.matmul %63, %64, %cst_24 {dimension_numbers = #tpu.dot_dimension_numbers<[1], [0], [0], [1], [0, 0, 1, 1], [], []>} : vector<64x64xf32>, vector<64x1xf32>, vector<64x1xf32> -> vector<64x1xf32>
    %c344 = arith.constant 344 : index
    %c0_25 = arith.constant 0 : index
    %66 = vector.load %arg3[%c344, %c0_25] : memref<792x128xf32, #tpu.memory_space<vmem>>, vector<1x1xf32>
    %67 = vector.broadcast %66 : vector<1x1xf32> to vector<64x1xf32>
    %68 = arith.addf %65, %67 : vector<64x1xf32>
    %69 = arith.negf %68 : vector<64x1xf32>
    %70 = math.exp %69 : vector<64x1xf32>
    %cst_26 = arith.constant 1.000000e+00 : f32
    %71 = vector.broadcast %cst_26 : f32 to vector<64x1xf32>
    %72 = arith.addf %71, %70 : vector<64x1xf32>
    %73 = arith.divf %71, %72 : vector<64x1xf32>
    %c0_27 = arith.constant 0 : index
    %c0_28 = arith.constant 0 : index
    %74 = vector.load %arg5[%c0_27, %c0_28] : memref<64x1xf32, #tpu.memory_space<vmem>>, vector<64x1xf32>
    tpu.vector_store %arg5[%c0_27, %c0_28], %73 {strides = array<i32>} : memref<64x1xf32, #tpu.memory_space<vmem>>, vector<64x1xf32>,
    %75 = vector.extract_strided_slice %30 {offsets = [0, 0], sizes = [32, 32], strides = [1, 1]} : vector<64x32xf32> to vector<32x32xf32>
    %76 = vector.extract_strided_slice %30 {offsets = [32, 0], sizes = [32, 32], strides = [1, 1]} : vector<64x32xf32> to vector<32x32xf32>
    %77 = arith.maximumf %75, %76 : vector<32x32xf32>
    %78 = vector.extract_strided_slice %77 {offsets = [0, 0], sizes = [16, 32], strides = [1, 1]} : vector<32x32xf32> to vector<16x32xf32>
    %79 = vector.extract_strided_slice %77 {offsets = [16, 0], sizes = [16, 32], strides = [1, 1]} : vector<32x32xf32> to vector<16x32xf32>
    %80 = arith.maximumf %78, %79 : vector<16x32xf32>
    %81 = vector.extract_strided_slice %80 {offsets = [0, 0], sizes = [8, 32], strides = [1, 1]} : vector<16x32xf32> to vector<8x32xf32>
    %82 = vector.extract_strided_slice %80 {offsets = [8, 0], sizes = [8, 32], strides = [1, 1]} : vector<16x32xf32> to vector<8x32xf32>
    %83 = arith.maximumf %81, %82 : vector<8x32xf32>
    %c352 = arith.constant 352 : index
    %c0_29 = arith.constant 0 : index
    %84 = vector.load %arg3[%c352, %c0_29] : memref<792x128xf32, #tpu.memory_space<vmem>>, vector<32x96xf32>
    %cst_30 = arith.constant dense<0.000000e+00> : vector<8x96xf32>
    %85 = tpu.matmul %83, %84, %cst_30 {dimension_numbers = #tpu.dot_dimension_numbers<[1], [0], [0], [1], [0, 0, 1, 1], [], []>} : vector<8x32xf32>, vector<32x96xf32>, vector<8x96xf32> -> vector<8x96xf32>
    %c384 = arith.constant 384 : index
    %c0_31 = arith.constant 0 : index
    %86 = vector.load %arg3[%c384, %c0_31] : memref<792x128xf32, #tpu.memory_space<vmem>>, vector<1x96xf32>
    %87 = vector.broadcast %86 : vector<1x96xf32> to vector<8x96xf32>
    %88 = arith.addf %85, %87 : vector<8x96xf32>
    %89 = vector.extract_strided_slice %88 {offsets = [0, 0], sizes = [8, 64], strides = [1, 1]} : vector<8x96xf32> to vector<8x64xf32>
    %c6 = arith.constant 6 : index
    %90 = memref.load %arg2[%c6] : memref<12xf32, #tpu.memory_space<smem>>
    %cst_32 = arith.constant 0.000000e+00 : f32
    %91 = vector.broadcast %cst_32 : f32 to vector<8x64xf32>
    %92 = arith.cmpf ogt, %89, %91 : vector<8x64xf32>
    %93 = vector.broadcast %90 : f32 to vector<8x64xf32>
    %94 = arith.mulf %93, %89 : vector<8x64xf32>
    %95 = arith.select %92, %89, %94 : vector<8x64xi1>, vector<8x64xf32>
    %96 = vector.extract_strided_slice %88 {offsets = [0, 64], sizes = [8, 32], strides = [1, 1]} : vector<8x96xf32> to vector<8x32xf32>
    %c11 = arith.constant 11 : index
    %97 = memref.load %arg2[%c11] : memref<12xf32, #tpu.memory_space<smem>>
    %cst_33 = arith.constant 0.000000e+00 : f32
    %98 = vector.broadcast %cst_33 : f32 to vector<8x32xf32>
    %99 = arith.cmpf ogt, %96, %98 : vector<8x32xf32>
    %100 = vector.broadcast %97 : f32 to vector<8x32xf32>
    %101 = arith.mulf %100, %96 : vector<8x32xf32>
    %102 = arith.select %99, %96, %101 : vector<8x32xi1>, vector<8x32xf32>
    %c392 = arith.constant 392 : index
    %c0_34 = arith.constant 0 : index
    %103 = vector.load %arg3[%c392, %c0_34] : memref<792x128xf32, #tpu.memory_space<vmem>>, vector<64x64xf32>
    %cst_35 = arith.constant dense<0.000000e+00> : vector<8x64xf32>
    %104 = tpu.matmul %95, %103, %cst_35 {dimension_numbers = #tpu.dot_dimension_numbers<[1], [0], [0], [1], [0, 0, 1, 1], [], []>} : vector<8x64xf32>, vector<64x64xf32>, vector<8x64xf32> -> vector<8x64xf32>
    %c456 = arith.constant 456 : index
    %c0_36 = arith.constant 0 : index
    %105 = vector.load %arg3[%c456, %c0_36] : memref<792x128xf32, #tpu.memory_space<vmem>>, vector<1x64xf32>
    %106 = vector.broadcast %105 : vector<1x64xf32> to vector<8x64xf32>
    %107 = arith.addf %104, %106 : vector<8x64xf32>
    %c7 = arith.constant 7 : index
    %108 = memref.load %arg2[%c7] : memref<12xf32, #tpu.memory_space<smem>>
    %cst_37 = arith.constant 0.000000e+00 : f32
    %109 = vector.broadcast %cst_37 : f32 to vector<8x64xf32>
    %110 = arith.cmpf ogt, %107, %109 : vector<8x64xf32>
    %111 = vector.broadcast %108 : f32 to vector<8x64xf32>
    %112 = arith.mulf %111, %107 : vector<8x64xf32>
    %113 = arith.select %110, %107, %112 : vector<8x64xi1>, vector<8x64xf32>
    %c464 = arith.constant 464 : index
    %c0_38 = arith.constant 0 : index
    %114 = vector.load %arg3[%c464, %c0_38] : memref<792x128xf32, #tpu.memory_space<vmem>>, vector<64x64xf32>
    %cst_39 = arith.constant dense<0.000000e+00> : vector<8x64xf32>
    %115 = tpu.matmul %113, %114, %cst_39 {dimension_numbers = #tpu.dot_dimension_numbers<[1], [0], [0], [1], [0, 0, 1, 1], [], []>} : vector<8x64xf32>, vector<64x64xf32>, vector<8x64xf32> -> vector<8x64xf32>
    %c528 = arith.constant 528 : index
    %c0_40 = arith.constant 0 : index
    %116 = vector.load %arg3[%c528, %c0_40] : memref<792x128xf32, #tpu.memory_space<vmem>>, vector<1x64xf32>
    %117 = vector.broadcast %116 : vector<1x64xf32> to vector<8x64xf32>
    %118 = arith.addf %115, %117 : vector<8x64xf32>
    %c8 = arith.constant 8 : index
    %119 = memref.load %arg2[%c8] : memref<12xf32, #tpu.memory_space<smem>>
    %cst_41 = arith.constant 0.000000e+00 : f32
    %120 = vector.broadcast %cst_41 : f32 to vector<8x64xf32>
    %121 = arith.cmpf ogt, %118, %120 : vector<8x64xf32>
    %122 = vector.broadcast %119 : f32 to vector<8x64xf32>
    %123 = arith.mulf %122, %118 : vector<8x64xf32>
    %124 = arith.select %121, %118, %123 : vector<8x64xi1>, vector<8x64xf32>
    %c536 = arith.constant 536 : index
    %c0_42 = arith.constant 0 : index
    %125 = vector.load %arg3[%c536, %c0_42] : memref<792x128xf32, #tpu.memory_space<vmem>>, vector<64x64xf32>
    %cst_43 = arith.constant dense<0.000000e+00> : vector<8x64xf32>
    %126 = tpu.matmul %124, %125, %cst_43 {dimension_numbers = #tpu.dot_dimension_numbers<[1], [0], [0], [1], [0, 0, 1, 1], [], []>} : vector<8x64xf32>, vector<64x64xf32>, vector<8x64xf32> -> vector<8x64xf32>
    %c600 = arith.constant 600 : index
    %c0_44 = arith.constant 0 : index
    %127 = vector.load %arg3[%c600, %c0_44] : memref<792x128xf32, #tpu.memory_space<vmem>>, vector<1x64xf32>
    %128 = vector.broadcast %127 : vector<1x64xf32> to vector<8x64xf32>
    %129 = arith.addf %126, %128 : vector<8x64xf32>
    %c9 = arith.constant 9 : index
    %130 = memref.load %arg2[%c9] : memref<12xf32, #tpu.memory_space<smem>>
    %cst_45 = arith.constant 0.000000e+00 : f32
    %131 = vector.broadcast %cst_45 : f32 to vector<8x64xf32>
    %132 = arith.cmpf ogt, %129, %131 : vector<8x64xf32>
    %133 = vector.broadcast %130 : f32 to vector<8x64xf32>
    %134 = arith.mulf %133, %129 : vector<8x64xf32>
    %135 = arith.select %132, %129, %134 : vector<8x64xi1>, vector<8x64xf32>
    %c608 = arith.constant 608 : index
    %c0_46 = arith.constant 0 : index
    %136 = vector.load %arg3[%c608, %c0_46] : memref<792x128xf32, #tpu.memory_space<vmem>>, vector<64x64xf32>
    %cst_47 = arith.constant dense<0.000000e+00> : vector<8x64xf32>
    %137 = tpu.matmul %135, %136, %cst_47 {dimension_numbers = #tpu.dot_dimension_numbers<[1], [0], [0], [1], [0, 0, 1, 1], [], []>} : vector<8x64xf32>, vector<64x64xf32>, vector<8x64xf32> -> vector<8x64xf32>
    %c672 = arith.constant 672 : index
    %c0_48 = arith.constant 0 : index
    %138 = vector.load %arg3[%c672, %c0_48] : memref<792x128xf32, #tpu.memory_space<vmem>>, vector<1x64xf32>
    %139 = vector.broadcast %138 : vector<1x64xf32> to vector<8x64xf32>
    %140 = arith.addf %137, %139 : vector<8x64xf32>
    %c10 = arith.constant 10 : index
    %141 = memref.load %arg2[%c10] : memref<12xf32, #tpu.memory_space<smem>>
    %cst_49 = arith.constant 0.000000e+00 : f32
    %142 = vector.broadcast %cst_49 : f32 to vector<8x64xf32>
    %143 = arith.cmpf ogt, %140, %142 : vector<8x64xf32>
    %144 = vector.broadcast %141 : f32 to vector<8x64xf32>
    %145 = arith.mulf %144, %140 : vector<8x64xf32>
    %146 = arith.select %143, %140, %145 : vector<8x64xi1>, vector<8x64xf32>
    %c680 = arith.constant 680 : index
    %c0_50 = arith.constant 0 : index
    %147 = vector.load %arg3[%c680, %c0_50] : memref<792x128xf32, #tpu.memory_space<vmem>>, vector<64x3xf32>
    %cst_51 = arith.constant dense<0.000000e+00> : vector<8x3xf32>
    %148 = tpu.matmul %146, %147, %cst_51 {dimension_numbers = #tpu.dot_dimension_numbers<[1], [0], [0], [1], [0, 0, 1, 1], [], []>} : vector<8x64xf32>, vector<64x3xf32>, vector<8x3xf32> -> vector<8x3xf32>
    %c744 = arith.constant 744 : index
    %c0_52 = arith.constant 0 : index
    %149 = vector.load %arg3[%c744, %c0_52] : memref<792x128xf32, #tpu.memory_space<vmem>>, vector<1x3xf32>
    %150 = vector.broadcast %149 : vector<1x3xf32> to vector<8x3xf32>
    %151 = arith.addf %148, %150 : vector<8x3xf32>
    %152 = vector.extract_strided_slice %151 {offsets = [0, 0], sizes = [8, 1], strides = [1, 1]} : vector<8x3xf32> to vector<8x1xf32>
    %cst_53 = arith.constant 0.000000e+00 : f32
    %153 = vector.broadcast %cst_53 : f32 to vector<8x1xf32>
    %154 = arith.maximumf %152, %153 : vector<8x1xf32>
    %cst_54 = arith.constant 0.785398185 : f32
    %155 = vector.broadcast %cst_54 : f32 to vector<8x1xf32>
    %156 = arith.addf %154, %155 : vector<8x1xf32>
    %157 = vector.extract_strided_slice %151 {offsets = [0, 1], sizes = [8, 1], strides = [1, 1]} : vector<8x3xf32> to vector<8x1xf32>
    %158 = math.tanh %157 : vector<8x1xf32>
    %cst_55 = arith.constant 3.14159274 : f32
    %159 = vector.broadcast %cst_55 : f32 to vector<8x1xf32>
    %160 = arith.mulf %158, %159 : vector<8x1xf32>
    %161 = vector.extract_strided_slice %151 {offsets = [0, 2], sizes = [8, 1], strides = [1, 1]} : vector<8x3xf32> to vector<8x1xf32>
    %162 = math.tanh %161 : vector<8x1xf32>
    %c752 = arith.constant 752 : index
    %c0_56 = arith.constant 0 : index
    %163 = vector.load %arg3[%c752, %c0_56] : memref<792x128xf32, #tpu.memory_space<vmem>>, vector<32x1xf32>
    %cst_57 = arith.constant dense<0.000000e+00> : vector<8x1xf32>
    %164 = tpu.matmul %102, %163, %cst_57 {dimension_numbers = #tpu.dot_dimension_numbers<[1], [0], [0], [1], [0, 0, 1, 1], [], []>} : vector<8x32xf32>, vector<32x1xf32>, vector<8x1xf32> -> vector<8x1xf32>
    %c784 = arith.constant 784 : index
    %c0_58 = arith.constant 0 : index
    %165 = vector.load %arg3[%c784, %c0_58] : memref<792x128xf32, #tpu.memory_space<vmem>>, vector<1x1xf32>
    %166 = vector.broadcast %165 : vector<1x1xf32> to vector<8x1xf32>
    %167 = arith.addf %164, %166 : vector<8x1xf32>
    %168 = arith.negf %167 : vector<8x1xf32>
    %169 = math.exp %168 : vector<8x1xf32>
    %cst_59 = arith.constant 1.000000e+00 : f32
    %170 = vector.broadcast %cst_59 : f32 to vector<8x1xf32>
    %171 = arith.addf %170, %169 : vector<8x1xf32>
    %172 = arith.divf %170, %171 : vector<8x1xf32>
    %cst_60 = arith.constant 8.000000e+00 : f32
    %173 = vector.broadcast %cst_60 : f32 to vector<8x1xf32>
    %174 = arith.mulf %172, %173 : vector<8x1xf32>
    %c0_61 = arith.constant 0 : index
    %c0_62 = arith.constant 0 : index
    %175 = vector.load %arg1[%c0_61, %c0_62] : memref<8x8xf32, #tpu.memory_space<vmem>>, vector<8x8xf32>
    %176 = vector.broadcast %156 : vector<8x1xf32> to vector<8x8xf32>
    %177 = arith.mulf %176, %175 : vector<8x8xf32>
    %178 = vector.broadcast %160 : vector<8x1xf32> to vector<8x8xf32>
    %179 = arith.addf %177, %178 : vector<8x8xf32>
    %180 = math.sin %179 : vector<8x8xf32>
    %181 = vector.broadcast %162 : vector<8x1xf32> to vector<8x8xf32>
    %182 = arith.subf %180, %181 : vector<8x8xf32>
    %cst_63 = arith.constant 2.500000e-01 : f32
    %183 = vector.broadcast %cst_63 : f32 to vector<8x8xf32>
    %184 = arith.mulf %182, %183 : vector<8x8xf32>
    %cst_64 = arith.constant 5.000000e-01 : f32
    %185 = vector.broadcast %cst_64 : f32 to vector<8x8xf32>
    %186 = arith.addf %184, %185 : vector<8x8xf32>
    %cst_65 = arith.constant 5.000000e-01 : f32
    %187 = vector.broadcast %cst_65 : f32 to vector<8x8xf32>
    %188 = arith.cmpf ogt, %186, %187 : vector<8x8xf32>
    %189 = arith.extui %188 : vector<8x8xi1> to vector<8x8xi32>
    %190 = arith.sitofp %189 : vector<8x8xi32> to vector<8x8xf32>
    %191 = tpu.concatenate %190, %156, %160, %162, %174 in 1 : vector<8x8xf32>, vector<8x1xf32>, vector<8x1xf32>, vector<8x1xf32>, vector<8x1xf32> -> vector<8x12xf32>
    %c0_66 = arith.constant 0 : index
    %c0_67 = arith.constant 0 : index
    %192 = vector.load %arg4[%c0_66, %c0_67] : memref<8x12xf32, #tpu.memory_space<vmem>>, vector<8x12xf32>
    tpu.vector_store %arg4[%c0_66, %c0_67], %191 {strides = array<i32>} : memref<8x12xf32, #tpu.memory_space<vmem>>, vector<8x12xf32>,
    return
  }
}

</mosaic_0001>

<llo_original>
// kernel: tpu_custom_call.1
$region0: #{tpu_custom_call.1}
  #allocation0 [shape = 'u32[]', space=smem, size = 0x4, offset = 0x4, fixed_abs, tag = 'smem constant byte address 0x4 - core index']
  #allocation1 [shape = 'u32[144,128]{1,0:T(1,128)}', space=vmem, size = 0x12000, scoped, tag = 'internal scratch']
  %s0 = inlined_call_operand.vmem [shape: f32[64,16], index: 0, kind: input, shape index: {}]
  %s1 = inlined_call_operand.vmem [shape: f32[8,8], index: 1, kind: input, shape index: {}]
  %s2 = inlined_call_operand.vmem [shape: f32[12], index: 2, kind: input, shape index: {}]
  %s3 = inlined_call_operand.hbm [shape: f32[792,128], index: 3, kind: input, shape index: {}]
  %s4 = inlined_call_operand.hbm [shape: f32[8,12], index: 4, kind: output, shape index: {0}]
  %s5 = inlined_call_operand.vmem [shape: f32[64,1], index: 5, kind: output, shape index: {1}]
  %6 = xla_tuple %s4, %s5
  %s7 = sld [smem:[#allocation0]]
  $region42: #{tpu_custom_call.1} parent=0
    _
  %s9 = ssub.s32 1, %s7
  %s10 = scalar_select 0, %s9, %s7
  $region1: #{tpu_custom_call.1} parent=0
    #allocation2 [shape = 'u8[512]{0}', space=smem, size = 0x200, scoped, tag = 'input window, operand 2, single buffered']
    #allocation3 [shape = 's32[1]{0}', space=sflag, size = 0x4, scoped, tag = 'scoped memory for tpu_custom_call.1']
    #allocation4 [shape = 's32[1]{0}', space=sflag, size = 0x4, scoped, tag = 'scoped memory for tpu_custom_call.1']
    #allocation5 [shape = 's32[1]{0}', space=sflag, size = 0x4, scoped, tag = 'scoped memory for tpu_custom_call.1']
    #allocation6 [shape = 'u8[405504]{0}', space=vmem, size = 0x63000, scoped, tag = 'input window, operand 3, single buffered']
    #allocation7 [shape = 'u8[4096]{0}', space=vmem, size = 0x1000, scoped, tag = 'output window, operand 0, single buffered']
    %11 = vsyncpa [#allocation5], 0
    %12 = vsyncpa [#allocation3], 0
    %13 = vsyncpa [#allocation4], 0
    // Predicated region
    $region2: #{tpu_custom_call.1} parent=1 // pred_check
      _
    $region3: #{tpu_custom_call.1} parent=1 // pred_check_branch
      %15 = sbr.rel (0) target = $region5
    $region4: #{tpu_custom_call.1} parent=1 // pred_region
      _
    $region5: #{tpu_custom_call.1} parent=1 // pred_fallthru
      _
    // Predicated region
    $region6: #{tpu_custom_call.1} parent=1 // pred_check
      _
    $region7: #{tpu_custom_call.1} parent=1 // pred_check_branch
      %17 = sbr.rel (0) target = $region9
    $region8: #{tpu_custom_call.1} parent=1 // pred_region
      _
    $region9: #{tpu_custom_call.1} parent=1 // pred_fallthru
      _
    // Predicated region
    $region10: #{tpu_custom_call.1} parent=1 // pred_check
      _
    $region11: #{tpu_custom_call.1} parent=1 // pred_check_branch
      %19 = sbr.rel (0) target = $region13
    $region12: #{tpu_custom_call.1} parent=1 // pred_region
      %s21 = ssub.s32 16, 16
      %22 = vsyncadd [#allocation5], %s21
      %s24 = sshll.u32 %s2, 4
      %s25 = int_to_ptr.vmem [resolvable:$true] %s24
      %27 = dma.vmem_to_smem %s25, 16, [#allocation2], [#allocation5]
    $region13: #{tpu_custom_call.1} parent=1 // pred_fallthru
      _
    // Predicated region
    $region14: #{tpu_custom_call.1} parent=1 // pred_check
      _
    $region15: #{tpu_custom_call.1} parent=1 // pred_check_branch
      %29 = sbr.rel (0) target = $region17
    $region16: #{tpu_custom_call.1} parent=1 // pred_region
      %s31 = ssub.s32 12672, 12672
      %32 = vsyncadd [#allocation3], %s31
      %s33 = sshll.u32 [#allocation6], 4
      %s34 = int_to_ptr.vmem [resolvable:$true] %s33
      %39 = dma.hbm_to_vmem [thread:$0]  %s3, 12672, %s34, [#allocation3], 128, 128, 8
    $region17: #{tpu_custom_call.1} parent=1 // pred_fallthru
      _
    // Predicated region
    $region18: #{tpu_custom_call.1} parent=1 // pred_check
      _
    $region19: #{tpu_custom_call.1} parent=1 // pred_check_branch
      %41 = sbr.rel (0) target = $region21
    $region20: #{tpu_custom_call.1} parent=1 // pred_region
      %42 = dma.done [#allocation5], 16
    $region21: #{tpu_custom_call.1} parent=1 // pred_fallthru
      _
    // Predicated region
    $region22: #{tpu_custom_call.1} parent=1 // pred_check
      _
    $region23: #{tpu_custom_call.1} parent=1 // pred_check_branch
      %44 = sbr.rel (0) target = $region25
    $region24: #{tpu_custom_call.1} parent=1 // pred_region
      %45 = dma.done [#allocation3], 12672
    $region25: #{tpu_custom_call.1} parent=1 // pred_fallthru
      _
    %46 = sfence
    %v47 = vld [vmem:[%s0] sm:$0xff]
    %v48 = vld [vmem:[%s0 + $0x8] sm:$0xff]
    %v49 = vld [vmem:[%s0 + $0x10] sm:$0xff]
    %v50 = vld [vmem:[%s0 + $0x18] sm:$0xff]
    %v51 = vld [vmem:[%s0 + $0x20] sm:$0xff]
    %v52 = vld [vmem:[%s0 + $0x28] sm:$0xff]
    %v53 = vld [vmem:[%s0 + $0x30] sm:$0xff]
    %v54 = vld [vmem:[%s0 + $0x38] sm:$0xff]
    %v55 = vld [vmem:[#allocation6] sm:$0xff]
    %v56 = vld [vmem:[#allocation6 + $0x8] sm:$0xff]
    %v57 = vld [vmem:[#allocation6 + $0x10] sm:$0x1]
    %v58 = vlaneseq
    %v59 = vshrl.u32 %v58, 7
    %v60 = vsub.s32 0, %v59
    %v61 = vrot.slane %v57, %v60
    %vm62 = vcmask 130048
    %v64 = vsel %vm62, %v47, 0
    %v67 = vsel %vm62, %v48, 0
    %v70 = vsel %vm62, %v49, 0
    %v73 = vsel %vm62, %v50, 0
    %v76 = vsel %vm62, %v51, 0
    %v79 = vsel %vm62, %v52, 0
    %v82 = vsel %vm62, %v53, 0
    %v85 = vsel %vm62, %v54, 0
    %87 = vmatprep.subr.mxu0 0.0
    %88 = vmatpush1.msra.mxu0 %v55
    %89 = vmatprep.subr.mxu0 0.0
    %90 = vmatpush1.msra.mxu0 %v56
    %91 = vmatprep.subr.mxu0 0.0
    %92 = vmatpush1.msra.mxu0 0.0
    %93 = vmatprep.subr.mxu0 0.0
    %94 = vmatpush1.msra.mxu0 0.0
    %95 = vmatprep.subr.mxu0 0.0
    %96 = vmatpush1.msra.mxu0 0.0
    %97 = vmatprep.subr.mxu0 0.0
    %98 = vmatpush1.msra.mxu0 0.0
    %99 = vmatprep.subr.mxu0 0.0
    %100 = vmatpush1.msra.mxu0 0.0
    %101 = vmatprep.subr.mxu0 0.0
    %102 = vmatpush1.msra.mxu0 0.0
    %103 = vmatprep.subr.mxu0 0.0
    %104 = vmatpush1.msra.mxu0 0.0
    %105 = vmatprep.subr.mxu0 0.0
    %106 = vmatpush1.msra.mxu0 0.0
    %107 = vmatprep.subr.mxu0 0.0
    %108 = vmatpush1.msra.mxu0 0.0
    %109 = vmatprep.subr.mxu0 0.0
    %110 = vmatpush1.msra.mxu0 0.0
    %111 = vmatprep.subr.mxu0 0.0
    %112 = vmatpush1.msra.mxu0 0.0
    %113 = vmatprep.subr.mxu0 0.0
    %114 = vmatpush1.msra.mxu0 0.0
    %115 = vmatprep.subr.mxu0 0.0
    %116 = vmatpush1.msra.mxu0 0.0
    %117 = vmatprep.subr.mxu0 0.0
    %118 = vmatpush1.msra.mxu0 0.0
    %119 = vmatprep.subr.mxu0 0.0
    %120 = vmatpush1.msra.mxu0 0.0
    %121 = vmatprep.subr.mxu0 0.0
    %122 = vmatpush1.msra.mxu0 0.0
    %123 = vmatprep.subr.mxu0 0.0
    %124 = vmatpush1.msra.mxu0 0.0
    %125 = vmatprep.subr.mxu0 0.0
    %126 = vmatpush1.msra.mxu0 0.0
    %127 = vmatprep.subr.mxu0 0.0
    %128 = vmatpush1.msra.mxu0 0.0
    %129 = vmatprep.subr.mxu0 0.0
    %130 = vmatpush1.msra.mxu0 0.0
    %131 = vmatprep.subr.mxu0 0.0
    %132 = vmatpush1.msra.mxu0 0.0
    %133 = vmatprep.subr.mxu0 0.0
    %134 = vmatpush1.msra.mxu0 0.0
    %135 = vmatprep.subr.mxu0 0.0
    %136 = vmatpush1.msra.mxu0 0.0
    %137 = vmatprep.subr.mxu0 0.0
    %138 = vmatpush1.msra.mxu0 0.0
    %139 = vmatprep.subr.mxu0 0.0
    %140 = vmatpush1.msra.mxu0 0.0
    %141 = vmatprep.subr.mxu0 0.0
    %142 = vmatpush1.msra.mxu0 0.0
    %143 = vmatprep.subr.mxu0 0.0
    %144 = vmatpush1.msra.mxu0 0.0
    %145 = vmatprep.subr.mxu0 0.0
    %146 = vmatpush1.msra.mxu0 0.0
    %147 = vmatprep.subr.mxu0 0.0
    %148 = vmatpush1.msra.mxu0 0.0
    %149 = vmatprep.subr.mxu0 0.0
    %150 = vmatpush1.msra.mxu0 0.0
    %151 = vmatprep.mubr.f32.mxu0 0.0
    %152 = vmatmul.mubr.f32.gmra.mrb[0].mxu0 %v64
    %v153 = vpop.f32.mrb[0].mxu0
    %v154 = vadd.f32 %v61, %v153
    %v155 = vpop.f32.mrb[0].mxu0
    %156 = vmatprep.mubr.f32.mxu0 0.0
    %157 = vmatmul.mubr.f32.gmra.mrb[0].mxu0 %v67
    %v158 = vpop.f32.mrb[0].mxu0
    %v159 = vadd.f32 %v61, %v158
    %v160 = vpop.f32.mrb[0].mxu0
    %161 = vmatprep.mubr.f32.mxu0 0.0
    %162 = vmatmul.mubr.f32.gmra.mrb[0].mxu0 %v70
    %v163 = vpop.f32.mrb[0].mxu0
    %v164 = vadd.f32 %v61, %v163
    %v165 = vpop.f32.mrb[0].mxu0
    %166 = vmatprep.mubr.f32.mxu0 0.0
    %167 = vmatmul.mubr.f32.gmra.mrb[0].mxu0 %v73
    %v168 = vpop.f32.mrb[0].mxu0
    %v169 = vadd.f32 %v61, %v168
    %v170 = vpop.f32.mrb[0].mxu0
    %171 = vmatprep.mubr.f32.mxu0 0.0
    %172 = vmatmul.mubr.f32.gmra.mrb[0].mxu0 %v76
    %v173 = vpop.f32.mrb[0].mxu0
    %v174 = vadd.f32 %v61, %v173
    %v175 = vpop.f32.mrb[0].mxu0
    %176 = vmatprep.mubr.f32.mxu0 0.0
    %177 = vmatmul.mubr.f32.gmra.mrb[0].mxu0 %v79
    %v178 = vpop.f32.mrb[0].mxu0
    %v179 = vadd.f32 %v61, %v178
    %v180 = vpop.f32.mrb[0].mxu0
    %181 = vmatprep.mubr.f32.mxu0 0.0
    %182 = vmatmul.mubr.f32.gmra.mrb[0].mxu0 %v82
    %v183 = vpop.f32.mrb[0].mxu0
    %v184 = vadd.f32 %v61, %v183
    %v185 = vpop.f32.mrb[0].mxu0
    %186 = vmatprep.mubr.f32.mxu0 0.0
    %187 = vmatmul.mubr.f32.gmra.mrb[0].mxu0 %v85
    %v188 = vpop.f32.mrb[0].mxu0
    %v189 = vadd.f32 %v61, %v188
    %v190 = vpop.f32.mrb[0].mxu0
    %191 = vdwg.mxu0
    %s192 = sld [smem:[#allocation2]]
    %vm193 = vcmp.gt.f32.partialorder %v154, 0.0
    %vm194 = vcmp.gt.f32.partialorder %v159, 0.0
    %vm195 = vcmp.gt.f32.partialorder %v164, 0.0
    %vm196 = vcmp.gt.f32.partialorder %v169, 0.0
    %vm197 = vcmp.gt.f32.partialorder %v174, 0.0
    %vm198 = vcmp.gt.f32.partialorder %v179, 0.0
    %vm199 = vcmp.gt.f32.partialorder %v184, 0.0
    %vm200 = vcmp.gt.f32.partialorder %v189, 0.0
    %v201 = vstv %s192
    %v202 = vmul.f32 %v201, %v154
    %v203 = vmul.f32 %v201, %v159
    %v204 = vmul.f32 %v201, %v164
    %v205 = vmul.f32 %v201, %v169
    %v206 = vmul.f32 %v201, %v174
    %v207 = vmul.f32 %v201, %v179
    %v208 = vmul.f32 %v201, %v184
    %v209 = vmul.f32 %v201, %v189
    %v210 = vsel %vm193, %v154, %v202
    %v211 = vsel %vm194, %v159, %v203
    %v212 = vsel %vm195, %v164, %v204
    %v213 = vsel %vm196, %v169, %v205
    %v214 = vsel %vm197, %v174, %v206
    %v215 = vsel %vm198, %v179, %v207
    %v216 = vsel %vm199, %v184, %v208
    %v217 = vsel %vm200, %v189, %v209
    %s218 = sld [smem:[#allocation2 + $0x2]]
    %v219 = vstv %s218
    %v220 = vmul.f32 %v219, %v154
    %v221 = vmul.f32 %v219, %v159
    %v222 = vmul.f32 %v219, %v164
    %v223 = vmul.f32 %v219, %v169
    %v224 = vmul.f32 %v219, %v174
    %v225 = vmul.f32 %v219, %v179
    %v226 = vmul.f32 %v219, %v184
    %v227 = vmul.f32 %v219, %v189
    %v228 = vsel %vm193, %v154, %v220
    %v229 = vsel %vm194, %v159, %v221
    %v230 = vsel %vm195, %v164, %v222
    %v231 = vsel %vm196, %v169, %v223
    %v232 = vsel %vm197, %v174, %v224
    %v233 = vsel %vm198, %v179, %v225
    %v234 = vsel %vm199, %v184, %v226
    %v235 = vsel %vm200, %v189, %v227
    %v236 = vld [vmem:[#allocation6 + $0x18] sm:$0xff]
    %v237 = vld [vmem:[#allocation6 + $0x20] sm:$0xff]
    %v238 = vld [vmem:[#allocation6 + $0x28] sm:$0xff]
    %v239 = vld [vmem:[#allocation6 + $0x30] sm:$0xff]
    %v240 = vld [vmem:[#allocation6 + $0x38] sm:$0x1]
    %v241 = vlaneseq
    %v242 = vshrl.u32 %v241, 7
    %v243 = vsub.s32 0, %v242
    %v244 = vrot.slane %v240, %v243
    %vm245 = vcmask 261120
    %v247 = vsel %vm245, %v210, 0
    %v250 = vsel %vm245, %v211, 0
    %v253 = vsel %vm245, %v212, 0
    %v256 = vsel %vm245, %v213, 0
    %v259 = vsel %vm245, %v214, 0
    %v262 = vsel %vm245, %v215, 0
    %v265 = vsel %vm245, %v216, 0
    %v268 = vsel %vm245, %v217, 0
    %270 = vmatprep.subr.mxu0 0.0
    %271 = vmatpush1.msra.mxu0 %v236
    %272 = vmatprep.subr.mxu0 0.0
    %273 = vmatpush1.msra.mxu0 %v237
    %274 = vmatprep.subr.mxu0 0.0
    %275 = vmatpush1.msra.mxu0 %v238
    %276 = vmatprep.subr.mxu0 0.0
    %277 = vmatpush1.msra.mxu0 %v239
    %278 = vmatprep.subr.mxu0 0.0
    %279 = vmatpush1.msra.mxu0 0.0
    %280 = vmatprep.subr.mxu0 0.0
    %281 = vmatpush1.msra.mxu0 0.0
    %282 = vmatprep.subr.mxu0 0.0
    %283 = vmatpush1.msra.mxu0 0.0
    %284 = vmatprep.subr.mxu0 0.0
    %285 = vmatpush1.msra.mxu0 0.0
    %286 = vmatprep.subr.mxu0 0.0
    %287 = vmatpush1.msra.mxu0 0.0
    %288 = vmatprep.subr.mxu0 0.0
    %289 = vmatpush1.msra.mxu0 0.0
    %290 = vmatprep.subr.mxu0 0.0
    %291 = vmatpush1.msra.mxu0 0.0
    %292 = vmatprep.subr.mxu0 0.0
    %293 = vmatpush1.msra.mxu0 0.0
    %294 = vmatprep.subr.mxu0 0.0
    %295 = vmatpush1.msra.mxu0 0.0
    %296 = vmatprep.subr.mxu0 0.0
    %297 = vmatpush1.msra.mxu0 0.0
    %298 = vmatprep.subr.mxu0 0.0
    %299 = vmatpush1.msra.mxu0 0.0
    %300 = vmatprep.subr.mxu0 0.0
    %301 = vmatpush1.msra.mxu0 0.0
    %302 = vmatprep.subr.mxu0 0.0
    %303 = vmatpush1.msra.mxu0 0.0
    %304 = vmatprep.subr.mxu0 0.0
    %305 = vmatpush1.msra.mxu0 0.0
    %306 = vmatprep.subr.mxu0 0.0
    %307 = vmatpush1.msra.mxu0 0.0
    %308 = vmatprep.subr.mxu0 0.0
    %309 = vmatpush1.msra.mxu0 0.0
    %310 = vmatprep.subr.mxu0 0.0
    %311 = vmatpush1.msra.mxu0 0.0
    %312 = vmatprep.subr.mxu0 0.0
    %313 = vmatpush1.msra.mxu0 0.0
    %314 = vmatprep.subr.mxu0 0.0
    %315 = vmatpush1.msra.mxu0 0.0
    %316 = vmatprep.subr.mxu0 0.0
    %317 = vmatpush1.msra.mxu0 0.0
    %318 = vmatprep.subr.mxu0 0.0
    %319 = vmatpush1.msra.mxu0 0.0
    %320 = vmatprep.subr.mxu0 0.0
    %321 = vmatpush1.msra.mxu0 0.0
    %322 = vmatprep.subr.mxu0 0.0
    %323 = vmatpush1.msra.mxu0 0.0
    %324 = vmatprep.subr.mxu0 0.0
    %325 = vmatpush1.msra.mxu0 0.0
    %326 = vmatprep.subr.mxu0 0.0
    %327 = vmatpush1.msra.mxu0 0.0
    %328 = vmatprep.subr.mxu0 0.0
    %329 = vmatpush1.msra.mxu0 0.0
    %330 = vmatprep.subr.mxu0 0.0
    %331 = vmatpush1.msra.mxu0 0.0
    %332 = vmatprep.subr.mxu0 0.0
    %333 = vmatpush1.msra.mxu0 0.0
    %334 = vmatprep.mubr.f32.mxu0 0.0
    %335 = vmatmul.mubr.f32.gmra.mrb[0].mxu0 %v247
    %v336 = vpop.f32.mrb[0].mxu0
    %v337 = vadd.f32 %v244, %v336
    %v338 = vpop.f32.mrb[0].mxu0
    %339 = vmatprep.mubr.f32.mxu0 0.0
    %340 = vmatmul.mubr.f32.gmra.mrb[0].mxu0 %v250
    %v341 = vpop.f32.mrb[0].mxu0
    %v342 = vadd.f32 %v244, %v341
    %v343 = vpop.f32.mrb[0].mxu0
    %344 = vmatprep.mubr.f32.mxu0 0.0
    %345 = vmatmul.mubr.f32.gmra.mrb[0].mxu0 %v253
    %v346 = vpop.f32.mrb[0].mxu0
    %v347 = vadd.f32 %v244, %v346
    %v348 = vpop.f32.mrb[0].mxu0
    %349 = vmatprep.mubr.f32.mxu0 0.0
    %350 = vmatmul.mubr.f32.gmra.mrb[0].mxu0 %v256
    %v351 = vpop.f32.mrb[0].mxu0
    %v352 = vadd.f32 %v244, %v351
    %v353 = vpop.f32.mrb[0].mxu0
    %354 = vmatprep.mubr.f32.mxu0 0.0
    %355 = vmatmul.mubr.f32.gmra.mrb[0].mxu0 %v259
    %v356 = vpop.f32.mrb[0].mxu0
    %v357 = vadd.f32 %v244, %v356
    %v358 = vpop.f32.mrb[0].mxu0
    %359 = vmatprep.mubr.f32.mxu0 0.0
    %360 = vmatmul.mubr.f32.gmra.mrb[0].mxu0 %v262
    %v361 = vpop.f32.mrb[0].mxu0
    %v362 = vadd.f32 %v244, %v361
    %v363 = vpop.f32.mrb[0].mxu0
    %364 = vmatprep.mubr.f32.mxu0 0.0
    %365 = vmatmul.mubr.f32.gmra.mrb[0].mxu0 %v265
    %v366 = vpop.f32.mrb[0].mxu0
    %v367 = vadd.f32 %v244, %v366
    %v368 = vpop.f32.mrb[0].mxu0
    %369 = vmatprep.mubr.f32.mxu0 0.0
    %370 = vmatmul.mubr.f32.gmra.mrb[0].mxu0 %v268
    %v371 = vpop.f32.mrb[0].mxu0
    %v372 = vadd.f32 %v244, %v371
    %v373 = vpop.f32.mrb[0].mxu0
    %374 = vdwg.mxu0
    %s375 = sld [smem:[#allocation2 + $0x1]]
    %vm376 = vcmp.gt.f32.partialorder %v337, 0.0
    %vm377 = vcmp.gt.f32.partialorder %v342, 0.0
    %vm378 = vcmp.gt.f32.partialorder %v347, 0.0
    %vm379 = vcmp.gt.f32.partialorder %v352, 0.0
    %vm380 = vcmp.gt.f32.partialorder %v357, 0.0
    %vm381 = vcmp.gt.f32.partialorder %v362, 0.0
    %vm382 = vcmp.gt.f32.partialorder %v367, 0.0
    %vm383 = vcmp.gt.f32.partialorder %v372, 0.0
    %v384 = vstv %s375
    %v385 = vmul.f32 %v384, %v337
    %v386 = vmul.f32 %v384, %v342
    %v387 = vmul.f32 %v384, %v347
    %v388 = vmul.f32 %v384, %v352
    %v389 = vmul.f32 %v384, %v357
    %v390 = vmul.f32 %v384, %v362
    %v391 = vmul.f32 %v384, %v367
    %v392 = vmul.f32 %v384, %v372
    %v393 = vsel %vm376, %v337, %v385
    %v394 = vsel %vm377, %v342, %v386
    %v395 = vsel %vm378, %v347, %v387
    %v396 = vsel %vm379, %v352, %v388
    %v397 = vsel %vm380, %v357, %v389
    %v398 = vsel %vm381, %v362, %v390
    %v399 = vsel %vm382, %v367, %v391
    %v400 = vsel %vm383, %v372, %v392
    %v401 = vld [vmem:[#allocation6 + $0x40] sm:$0xff]
    %v402 = vld [vmem:[#allocation6 + $0x48] sm:$0xff]
    %v403 = vld [vmem:[#allocation6 + $0x50] sm:$0xff]
    %v404 = vld [vmem:[#allocation6 + $0x58] sm:$0xff]
    %v405 = vld [vmem:[#allocation6 + $0x60] sm:$0xff]
    %v406 = vld [vmem:[#allocation6 + $0x68] sm:$0xff]
    %v407 = vld [vmem:[#allocation6 + $0x70] sm:$0xff]
    %v408 = vld [vmem:[#allocation6 + $0x78] sm:$0xff]
    %v409 = vld [vmem:[#allocation6 + $0x80] sm:$0x1]
    %v410 = vlaneseq
    %v411 = vshrl.u32 %v410, 7
    %v412 = vsub.s32 0, %v411
    %v413 = vrot.slane %v409, %v412
    %422 = vrot.lane.b32.xlu0 %v228, 96
    %v423 = vpop.permute.xlu0 %422
    %424 = vrot.lane.b32.xlu0 %v229, 96
    %v425 = vpop.permute.xlu0 %424
    %426 = vrot.lane.b32.xlu0 %v230, 96
    %v427 = vpop.permute.xlu0 %426
    %428 = vrot.lane.b32.xlu0 %v231, 96
    %v429 = vpop.permute.xlu0 %428
    %430 = vrot.lane.b32.xlu0 %v232, 96
    %v431 = vpop.permute.xlu0 %430
    %432 = vrot.lane.b32.xlu0 %v233, 96
    %v433 = vpop.permute.xlu0 %432
    %434 = vrot.lane.b32.xlu0 %v234, 96
    %v435 = vpop.permute.xlu0 %434
    %436 = vrot.lane.b32.xlu0 %v235, 96
    %v437 = vpop.permute.xlu0 %436
    %vm438 = vcmask 523264
    %v439 = vsel %vm438, %v423, 0
    %v441 = vsel %vm438, %v425, 0
    %v443 = vsel %vm438, %v427, 0
    %v445 = vsel %vm438, %v429, 0
    %v447 = vsel %vm438, %v431, 0
    %v449 = vsel %vm438, %v433, 0
    %v451 = vsel %vm438, %v435, 0
    %v453 = vsel %vm438, %v437, 0
    %455 = vmatprep.subr.mxu0 0.0
    %456 = vmatpush1.msra.mxu0 %v401
    %457 = vmatprep.subr.mxu0 0.0
    %458 = vmatpush1.msra.mxu0 %v402
    %459 = vmatprep.subr.mxu0 0.0
    %460 = vmatpush1.msra.mxu0 %v403
    %461 = vmatprep.subr.mxu0 0.0
    %462 = vmatpush1.msra.mxu0 %v404
    %463 = vmatprep.subr.mxu0 0.0
    %464 = vmatpush1.msra.mxu0 %v405
    %465 = vmatprep.subr.mxu0 0.0
    %466 = vmatpush1.msra.mxu0 %v406
    %467 = vmatprep.subr.mxu0 0.0
    %468 = vmatpush1.msra.mxu0 %v407
    %469 = vmatprep.subr.mxu0 0.0
    %470 = vmatpush1.msra.mxu0 %v408
    %471 = vmatprep.subr.mxu0 0.0
    %472 = vmatpush1.msra.mxu0 0.0
    %473 = vmatprep.subr.mxu0 0.0
    %474 = vmatpush1.msra.mxu0 0.0
    %475 = vmatprep.subr.mxu0 0.0
    %476 = vmatpush1.msra.mxu0 0.0
    %477 = vmatprep.subr.mxu0 0.0
    %478 = vmatpush1.msra.mxu0 0.0
    %479 = vmatprep.subr.mxu0 0.0
    %480 = vmatpush1.msra.mxu0 0.0
    %481 = vmatprep.subr.mxu0 0.0
    %482 = vmatpush1.msra.mxu0 0.0
    %483 = vmatprep.subr.mxu0 0.0
    %484 = vmatpush1.msra.mxu0 0.0
    %485 = vmatprep.subr.mxu0 0.0
    %486 = vmatpush1.msra.mxu0 0.0
    %487 = vmatprep.subr.mxu0 0.0
    %488 = vmatpush1.msra.mxu0 0.0
    %489 = vmatprep.subr.mxu0 0.0
    %490 = vmatpush1.msra.mxu0 0.0
    %491 = vmatprep.subr.mxu0 0.0
    %492 = vmatpush1.msra.mxu0 0.0
    %493 = vmatprep.subr.mxu0 0.0
    %494 = vmatpush1.msra.mxu0 0.0
    %495 = vmatprep.subr.mxu0 0.0
    %496 = vmatpush1.msra.mxu0 0.0
    %497 = vmatprep.subr.mxu0 0.0
    %498 = vmatpush1.msra.mxu0 0.0
    %499 = vmatprep.subr.mxu0 0.0
    %500 = vmatpush1.msra.mxu0 0.0
    %501 = vmatprep.subr.mxu0 0.0
    %502 = vmatpush1.msra.mxu0 0.0
    %503 = vmatprep.subr.mxu0 0.0
    %504 = vmatpush1.msra.mxu0 0.0
    %505 = vmatprep.subr.mxu0 0.0
    %506 = vmatpush1.msra.mxu0 0.0
    %507 = vmatprep.subr.mxu0 0.0
    %508 = vmatpush1.msra.mxu0 0.0
    %509 = vmatprep.subr.mxu0 0.0
    %510 = vmatpush1.msra.mxu0 0.0
    %511 = vmatprep.subr.mxu0 0.0
    %512 = vmatpush1.msra.mxu0 0.0
    %513 = vmatprep.subr.mxu0 0.0
    %514 = vmatpush1.msra.mxu0 0.0
    %515 = vmatprep.subr.mxu0 0.0
    %516 = vmatpush1.msra.mxu0 0.0
    %517 = vmatprep.subr.mxu0 0.0
    %518 = vmatpush1.msra.mxu0 0.0
    %519 = vmatprep.mubr.f32.mxu0 0.0
    %520 = vmatmul.mubr.f32.gmra.mrb[0].mxu0 %v439
    %v521 = vpop.f32.mrb[0].mxu0
    %v522 = vadd.f32 %v413, %v521
    %v523 = vpop.f32.mrb[0].mxu0
    %524 = vmatprep.mubr.f32.mxu0 0.0
    %525 = vmatmul.mubr.f32.gmra.mrb[0].mxu0 %v441
    %v526 = vpop.f32.mrb[0].mxu0
    %v527 = vadd.f32 %v413, %v526
    %v528 = vpop.f32.mrb[0].mxu0
    %529 = vmatprep.mubr.f32.mxu0 0.0
    %530 = vmatmul.mubr.f32.gmra.mrb[0].mxu0 %v443
    %v531 = vpop.f32.mrb[0].mxu0
    %v532 = vadd.f32 %v413, %v531
    %v533 = vpop.f32.mrb[0].mxu0
    %534 = vmatprep.mubr.f32.mxu0 0.0
    %535 = vmatmul.mubr.f32.gmra.mrb[0].mxu0 %v445
    %v536 = vpop.f32.mrb[0].mxu0
    %v537 = vadd.f32 %v413, %v536
    %v538 = vpop.f32.mrb[0].mxu0
    %539 = vmatprep.mubr.f32.mxu0 0.0
    %540 = vmatmul.mubr.f32.gmra.mrb[0].mxu0 %v447
    %v541 = vpop.f32.mrb[0].mxu0
    %v542 = vadd.f32 %v413, %v541
    %v543 = vpop.f32.mrb[0].mxu0
    %544 = vmatprep.mubr.f32.mxu0 0.0
    %545 = vmatmul.mubr.f32.gmra.mrb[0].mxu0 %v449
    %v546 = vpop.f32.mrb[0].mxu0
    %v547 = vadd.f32 %v413, %v546
    %v548 = vpop.f32.mrb[0].mxu0
    %549 = vmatprep.mubr.f32.mxu0 0.0
    %550 = vmatmul.mubr.f32.gmra.mrb[0].mxu0 %v451
    %v551 = vpop.f32.mrb[0].mxu0
    %v552 = vadd.f32 %v413, %v551
    %v553 = vpop.f32.mrb[0].mxu0
    %554 = vmatprep.mubr.f32.mxu0 0.0
    %555 = vmatmul.mubr.f32.gmra.mrb[0].mxu0 %v453
    %v556 = vpop.f32.mrb[0].mxu0
    %v557 = vadd.f32 %v413, %v556
    %v558 = vpop.f32.mrb[0].mxu0
    %559 = vdwg.mxu0
    %s560 = sld [smem:[#allocation2 + $0x3]]
    %vm561 = vcmp.gt.f32.partialorder %v522, 0.0
    %vm562 = vcmp.gt.f32.partialorder %v527, 0.0
    %vm563 = vcmp.gt.f32.partialorder %v532, 0.0
    %vm564 = vcmp.gt.f32.partialorder %v537, 0.0
    %vm565 = vcmp.gt.f32.partialorder %v542, 0.0
    %vm566 = vcmp.gt.f32.partialorder %v547, 0.0
    %vm567 = vcmp.gt.f32.partialorder %v552, 0.0
    %vm568 = vcmp.gt.f32.partialorder %v557, 0.0
    %v569 = vstv %s560
    %v570 = vmul.f32 %v569, %v522
    %v571 = vmul.f32 %v569, %v527
    %v572 = vmul.f32 %v569, %v532
    %v573 = vmul.f32 %v569, %v537
    %v574 = vmul.f32 %v569, %v542
    %v575 = vmul.f32 %v569, %v547
    %v576 = vmul.f32 %v569, %v552
    %v577 = vmul.f32 %v569, %v557
    %v578 = vsel %vm561, %v522, %v570
    %v579 = vsel %vm562, %v527, %v571
    %v580 = vsel %vm563, %v532, %v572
    %v581 = vsel %vm564, %v537, %v573
    %v582 = vsel %vm565, %v542, %v574
    %v583 = vsel %vm566, %v547, %v575
    %v584 = vsel %vm567, %v552, %v576
    %v585 = vsel %vm568, %v557, %v577
    %v586 = vld [vmem:[#allocation6 + $0x88] sm:$0xff]
    %v587 = vld [vmem:[#allocation6 + $0x90] sm:$0xff]
    %v588 = vld [vmem:[#allocation6 + $0x98] sm:$0xff]
    %v589 = vld [vmem:[#allocation6 + $0xa0] sm:$0xff]
    %v590 = vld [vmem:[#allocation6 + $0xa8] sm:$0xff]
    %v591 = vld [vmem:[#allocation6 + $0xb0] sm:$0xff]
    %v592 = vld [vmem:[#allocation6 + $0xb8] sm:$0xff]
    %v593 = vld [vmem:[#allocation6 + $0xc0] sm:$0xff]
    %v594 = vld [vmem:[#allocation6 + $0xc8] sm:$0x1]
    %v595 = vlaneseq
    %v596 = vshrl.u32 %v595, 7
    %v597 = vsub.s32 0, %v596
    %v598 = vrot.slane %v594, %v597
    %v600 = vsel %vm438, %v578, 0
    %v603 = vsel %vm438, %v579, 0
    %v606 = vsel %vm438, %v580, 0
    %v609 = vsel %vm438, %v581, 0
    %v612 = vsel %vm438, %v582, 0
    %v615 = vsel %vm438, %v583, 0
    %v618 = vsel %vm438, %v584, 0
    %v621 = vsel %vm438, %v585, 0
    %623 = vmatprep.subr.mxu0 0.0
    %624 = vmatpush1.msra.mxu0 %v586
    %625 = vmatprep.subr.mxu0 0.0
    %626 = vmatpush1.msra.mxu0 %v587
    %627 = vmatprep.subr.mxu0 0.0
    %628 = vmatpush1.msra.mxu0 %v588
    %629 = vmatprep.subr.mxu0 0.0
    %630 = vmatpush1.msra.mxu0 %v589
    %631 = vmatprep.subr.mxu0 0.0
    %632 = vmatpush1.msra.mxu0 %v590
    %633 = vmatprep.subr.mxu0 0.0
    %634 = vmatpush1.msra.mxu0 %v591
    %635 = vmatprep.subr.mxu0 0.0
    %636 = vmatpush1.msra.mxu0 %v592
    %637 = vmatprep.subr.mxu0 0.0
    %638 = vmatpush1.msra.mxu0 %v593
    %639 = vmatprep.subr.mxu0 0.0
    %640 = vmatpush1.msra.mxu0 0.0
    %641 = vmatprep.subr.mxu0 0.0
    %642 = vmatpush1.msra.mxu0 0.0
    %643 = vmatprep.subr.mxu0 0.0
    %644 = vmatpush1.msra.mxu0 0.0
    %645 = vmatprep.subr.mxu0 0.0
    %646 = vmatpush1.msra.mxu0 0.0
    %647 = vmatprep.subr.mxu0 0.0
    %648 = vmatpush1.msra.mxu0 0.0
    %649 = vmatprep.subr.mxu0 0.0
    %650 = vmatpush1.msra.mxu0 0.0
    %651 = vmatprep.subr.mxu0 0.0
    %652 = vmatpush1.msra.mxu0 0.0
    %653 = vmatprep.subr.mxu0 0.0
    %654 = vmatpush1.msra.mxu0 0.0
    %655 = vmatprep.subr.mxu0 0.0
    %656 = vmatpush1.msra.mxu0 0.0
    %657 = vmatprep.subr.mxu0 0.0
    %658 = vmatpush1.msra.mxu0 0.0
    %659 = vmatprep.subr.mxu0 0.0
    %660 = vmatpush1.msra.mxu0 0.0
    %661 = vmatprep.subr.mxu0 0.0
    %662 = vmatpush1.msra.mxu0 0.0
    %663 = vmatprep.subr.mxu0 0.0
    %664 = vmatpush1.msra.mxu0 0.0
    %665 = vmatprep.subr.mxu0 0.0
    %666 = vmatpush1.msra.mxu0 0.0
    %667 = vmatprep.subr.mxu0 0.0
    %668 = vmatpush1.msra.mxu0 0.0
    %669 = vmatprep.subr.mxu0 0.0
    %670 = vmatpush1.msra.mxu0 0.0
    %671 = vmatprep.subr.mxu0 0.0
    %672 = vmatpush1.msra.mxu0 0.0
    %673 = vmatprep.subr.mxu0 0.0
    %674 = vmatpush1.msra.mxu0 0.0
    %675 = vmatprep.subr.mxu0 0.0
    %676 = vmatpush1.msra.mxu0 0.0
    %677 = vmatprep.subr.mxu0 0.0
    %678 = vmatpush1.msra.mxu0 0.0
    %679 = vmatprep.subr.mxu0 0.0
    %680 = vmatpush1.msra.mxu0 0.0
    %681 = vmatprep.subr.mxu0 0.0
    %682 = vmatpush1.msra.mxu0 0.0
    %683 = vmatprep.subr.mxu0 0.0
    %684 = vmatpush1.msra.mxu0 0.0
    %685 = vmatprep.subr.mxu0 0.0
    %686 = vmatpush1.msra.mxu0 0.0
    %687 = vmatprep.mubr.f32.mxu0 0.0
    %688 = vmatmul.mubr.f32.gmra.mrb[0].mxu0 %v600
    %v689 = vpop.f32.mrb[0].mxu0
    %v690 = vadd.f32 %v598, %v689
    %v691 = vpop.f32.mrb[0].mxu0
    %692 = vmatprep.mubr.f32.mxu0 0.0
    %693 = vmatmul.mubr.f32.gmra.mrb[0].mxu0 %v603
    %v694 = vpop.f32.mrb[0].mxu0
    %v695 = vadd.f32 %v598, %v694
    %v696 = vpop.f32.mrb[0].mxu0
    %697 = vmatprep.mubr.f32.mxu0 0.0
    %698 = vmatmul.mubr.f32.gmra.mrb[0].mxu0 %v606
    %v699 = vpop.f32.mrb[0].mxu0
    %v700 = vadd.f32 %v598, %v699
    %v701 = vpop.f32.mrb[0].mxu0
    %702 = vmatprep.mubr.f32.mxu0 0.0
    %703 = vmatmul.mubr.f32.gmra.mrb[0].mxu0 %v609
    %v704 = vpop.f32.mrb[0].mxu0
    %v705 = vadd.f32 %v598, %v704
    %v706 = vpop.f32.mrb[0].mxu0
    %707 = vmatprep.mubr.f32.mxu0 0.0
    %708 = vmatmul.mubr.f32.gmra.mrb[0].mxu0 %v612
    %v709 = vpop.f32.mrb[0].mxu0
    %v710 = vadd.f32 %v598, %v709
    %v711 = vpop.f32.mrb[0].mxu0
    %712 = vmatprep.mubr.f32.mxu0 0.0
    %713 = vmatmul.mubr.f32.gmra.mrb[0].mxu0 %v615
    %v714 = vpop.f32.mrb[0].mxu0
    %v715 = vadd.f32 %v598, %v714
    %v716 = vpop.f32.mrb[0].mxu0
    %717 = vmatprep.mubr.f32.mxu0 0.0
    %718 = vmatmul.mubr.f32.gmra.mrb[0].mxu0 %v618
    %v719 = vpop.f32.mrb[0].mxu0
    %v720 = vadd.f32 %v598, %v719
    %v721 = vpop.f32.mrb[0].mxu0
    %722 = vmatprep.mubr.f32.mxu0 0.0
    %723 = vmatmul.mubr.f32.gmra.mrb[0].mxu0 %v621
    %v724 = vpop.f32.mrb[0].mxu0
    %v725 = vadd.f32 %v598, %v724
    %v726 = vpop.f32.mrb[0].mxu0
    %727 = vdwg.mxu0
    %s728 = sld [smem:[#allocation2 + $0x4]]
    %vm729 = vcmp.gt.f32.partialorder %v690, 0.0
    %vm730 = vcmp.gt.f32.partialorder %v695, 0.0
    %vm731 = vcmp.gt.f32.partialorder %v700, 0.0
    %vm732 = vcmp.gt.f32.partialorder %v705, 0.0
    %vm733 = vcmp.gt.f32.partialorder %v710, 0.0
    %vm734 = vcmp.gt.f32.partialorder %v715, 0.0
    %vm735 = vcmp.gt.f32.partialorder %v720, 0.0
    %vm736 = vcmp.gt.f32.partialorder %v725, 0.0
    %v737 = vstv %s728
    %v738 = vmul.f32 %v737, %v690
    %v739 = vmul.f32 %v737, %v695
    %v740 = vmul.f32 %v737, %v700
    %v741 = vmul.f32 %v737, %v705
    %v742 = vmul.f32 %v737, %v710
    %v743 = vmul.f32 %v737, %v715
    %v744 = vmul.f32 %v737, %v720
    %v745 = vmul.f32 %v737, %v725
    %v746 = vsel %vm729, %v690, %v738
    %v747 = vsel %vm730, %v695, %v739
    %v748 = vsel %vm731, %v700, %v740
    %v749 = vsel %vm732, %v705, %v741
    %v750 = vsel %vm733, %v710, %v742
    %v751 = vsel %vm734, %v715, %v743
    %v752 = vsel %vm735, %v720, %v744
    %v753 = vsel %vm736, %v725, %v745
    %v754 = vld [vmem:[#allocation6 + $0xd0] sm:$0xff]
    %v755 = vld [vmem:[#allocation6 + $0xd8] sm:$0xff]
    %v756 = vld [vmem:[#allocation6 + $0xe0] sm:$0xff]
    %v757 = vld [vmem:[#allocation6 + $0xe8] sm:$0xff]
    %v758 = vld [vmem:[#allocation6 + $0xf0] sm:$0xff]
    %v759 = vld [vmem:[#allocation6 + $0xf8] sm:$0xff]
    %v760 = vld [vmem:[#allocation6 + $0x100] sm:$0xff]
    %v761 = vld [vmem:[#allocation6 + $0x108] sm:$0xff]
    %v762 = vld [vmem:[#allocation6 + $0x110] sm:$0x1]
    %v763 = vlaneseq
    %v764 = vshrl.u32 %v763, 7
    %v765 = vsub.s32 0, %v764
    %v766 = vrot.slane %v762, %v765
    %v768 = vsel %vm438, %v746, 0
    %v771 = vsel %vm438, %v747, 0
    %v774 = vsel %vm438, %v748, 0
    %v777 = vsel %vm438, %v749, 0
    %v780 = vsel %vm438, %v750, 0
    %v783 = vsel %vm438, %v751, 0
    %v786 = vsel %vm438, %v752, 0
    %v789 = vsel %vm438, %v753, 0
    %791 = vmatprep.subr.mxu0 0.0
    %792 = vmatpush1.msra.mxu0 %v754
    %793 = vmatprep.subr.mxu0 0.0
    %794 = vmatpush1.msra.mxu0 %v755
    %795 = vmatprep.subr.mxu0 0.0
    %796 = vmatpush1.msra.mxu0 %v756
    %797 = vmatprep.subr.mxu0 0.0
    %798 = vmatpush1.msra.mxu0 %v757
    %799 = vmatprep.subr.mxu0 0.0
    %800 = vmatpush1.msra.mxu0 %v758
    %801 = vmatprep.subr.mxu0 0.0
    %802 = vmatpush1.msra.mxu0 %v759
    %803 = vmatprep.subr.mxu0 0.0
    %804 = vmatpush1.msra.mxu0 %v760
    %805 = vmatprep.subr.mxu0 0.0
    %806 = vmatpush1.msra.mxu0 %v761
    %807 = vmatprep.subr.mxu0 0.0
    %808 = vmatpush1.msra.mxu0 0.0
    %809 = vmatprep.subr.mxu0 0.0
    %810 = vmatpush1.msra.mxu0 0.0
    %811 = vmatprep.subr.mxu0 0.0
    %812 = vmatpush1.msra.mxu0 0.0
    %813 = vmatprep.subr.mxu0 0.0
    %814 = vmatpush1.msra.mxu0 0.0
    %815 = vmatprep.subr.mxu0 0.0
    %816 = vmatpush1.msra.mxu0 0.0
    %817 = vmatprep.subr.mxu0 0.0
    %818 = vmatpush1.msra.mxu0 0.0
    %819 = vmatprep.subr.mxu0 0.0
    %820 = vmatpush1.msra.mxu0 0.0
    %821 = vmatprep.subr.mxu0 0.0
    %822 = vmatpush1.msra.mxu0 0.0
    %823 = vmatprep.subr.mxu0 0.0
    %824 = vmatpush1.msra.mxu0 0.0
    %825 = vmatprep.subr.mxu0 0.0
    %826 = vmatpush1.msra.mxu0 0.0
    %827 = vmatprep.subr.mxu0 0.0
    %828 = vmatpush1.msra.mxu0 0.0
    %829 = vmatprep.subr.mxu0 0.0
    %830 = vmatpush1.msra.mxu0 0.0
    %831 = vmatprep.subr.mxu0 0.0
    %832 = vmatpush1.msra.mxu0 0.0
    %833 = vmatprep.subr.mxu0 0.0
    %834 = vmatpush1.msra.mxu0 0.0
    %835 = vmatprep.subr.mxu0 0.0
    %836 = vmatpush1.msra.mxu0 0.0
    %837 = vmatprep.subr.mxu0 0.0
    %838 = vmatpush1.msra.mxu0 0.0
    %839 = vmatprep.subr.mxu0 0.0
    %840 = vmatpush1.msra.mxu0 0.0
    %841 = vmatprep.subr.mxu0 0.0
    %842 = vmatpush1.msra.mxu0 0.0
    %843 = vmatprep.subr.mxu0 0.0
    %844 = vmatpush1.msra.mxu0 0.0
    %845 = vmatprep.subr.mxu0 0.0
    %846 = vmatpush1.msra.mxu0 0.0
    %847 = vmatprep.subr.mxu0 0.0
    %848 = vmatpush1.msra.mxu0 0.0
    %849 = vmatprep.subr.mxu0 0.0
    %850 = vmatpush1.msra.mxu0 0.0
    %851 = vmatprep.subr.mxu0 0.0
    %852 = vmatpush1.msra.mxu0 0.0
    %853 = vmatprep.subr.mxu0 0.0
    %854 = vmatpush1.msra.mxu0 0.0
    %855 = vmatprep.mubr.f32.mxu0 0.0
    %856 = vmatmul.mubr.f32.gmra.mrb[0].mxu0 %v768
    %v857 = vpop.f32.mrb[0].mxu0
    %v858 = vadd.f32 %v766, %v857
    %v859 = vpop.f32.mrb[0].mxu0
    %860 = vmatprep.mubr.f32.mxu0 0.0
    %861 = vmatmul.mubr.f32.gmra.mrb[0].mxu0 %v771
    %v862 = vpop.f32.mrb[0].mxu0
    %v863 = vadd.f32 %v766, %v862
    %v864 = vpop.f32.mrb[0].mxu0
    %865 = vmatprep.mubr.f32.mxu0 0.0
    %866 = vmatmul.mubr.f32.gmra.mrb[0].mxu0 %v774
    %v867 = vpop.f32.mrb[0].mxu0
    %v868 = vadd.f32 %v766, %v867
    %v869 = vpop.f32.mrb[0].mxu0
    %870 = vmatprep.mubr.f32.mxu0 0.0
    %871 = vmatmul.mubr.f32.gmra.mrb[0].mxu0 %v777
    %v872 = vpop.f32.mrb[0].mxu0
    %v873 = vadd.f32 %v766, %v872
    %v874 = vpop.f32.mrb[0].mxu0
    %875 = vmatprep.mubr.f32.mxu0 0.0
    %876 = vmatmul.mubr.f32.gmra.mrb[0].mxu0 %v780
    %v877 = vpop.f32.mrb[0].mxu0
    %v878 = vadd.f32 %v766, %v877
    %v879 = vpop.f32.mrb[0].mxu0
    %880 = vmatprep.mubr.f32.mxu0 0.0
    %881 = vmatmul.mubr.f32.gmra.mrb[0].mxu0 %v783
    %v882 = vpop.f32.mrb[0].mxu0
    %v883 = vadd.f32 %v766, %v882
    %v884 = vpop.f32.mrb[0].mxu0
    %885 = vmatprep.mubr.f32.mxu0 0.0
    %886 = vmatmul.mubr.f32.gmra.mrb[0].mxu0 %v786
    %v887 = vpop.f32.mrb[0].mxu0
    %v888 = vadd.f32 %v766, %v887
    %v889 = vpop.f32.mrb[0].mxu0
    %890 = vmatprep.mubr.f32.mxu0 0.0
    %891 = vmatmul.mubr.f32.gmra.mrb[0].mxu0 %v789
    %v892 = vpop.f32.mrb[0].mxu0
    %v893 = vadd.f32 %v766, %v892
    %v894 = vpop.f32.mrb[0].mxu0
    %895 = vdwg.mxu0
    %s896 = sld [smem:[#allocation2 + $0x5]]
    %vm897 = vcmp.gt.f32.partialorder %v858, 0.0
    %vm898 = vcmp.gt.f32.partialorder %v863, 0.0
    %vm899 = vcmp.gt.f32.partialorder %v868, 0.0
    %vm900 = vcmp.gt.f32.partialorder %v873, 0.0
    %vm901 = vcmp.gt.f32.partialorder %v878, 0.0
    %vm902 = vcmp.gt.f32.partialorder %v883, 0.0
    %vm903 = vcmp.gt.f32.partialorder %v888, 0.0
    %vm904 = vcmp.gt.f32.partialorder %v893, 0.0
    %v905 = vstv %s896
    %v906 = vmul.f32 %v905, %v858
    %v907 = vmul.f32 %v905, %v863
    %v908 = vmul.f32 %v905, %v868
    %v909 = vmul.f32 %v905, %v873
    %v910 = vmul.f32 %v905, %v878
    %v911 = vmul.f32 %v905, %v883
    %v912 = vmul.f32 %v905, %v888
    %v913 = vmul.f32 %v905, %v893
    %v914 = vsel %vm897, %v858, %v906
    %v915 = vsel %vm898, %v863, %v907
    %v916 = vsel %vm899, %v868, %v908
    %v917 = vsel %vm900, %v873, %v909
    %v918 = vsel %vm901, %v878, %v910
    %v919 = vsel %vm902, %v883, %v911
    %v920 = vsel %vm903, %v888, %v912
    %v921 = vsel %vm904, %v893, %v913
    %v922 = vld [vmem:[#allocation6 + $0x118] sm:$0xff]
    %v923 = vld [vmem:[#allocation6 + $0x120] sm:$0xff]
    %v924 = vld [vmem:[#allocation6 + $0x128] sm:$0xff]
    %v925 = vld [vmem:[#allocation6 + $0x130] sm:$0xff]
    %v926 = vld [vmem:[#allocation6 + $0x138] sm:$0xff]
    %v927 = vld [vmem:[#allocation6 + $0x140] sm:$0xff]
    %v928 = vld [vmem:[#allocation6 + $0x148] sm:$0xff]
    %v929 = vld [vmem:[#allocation6 + $0x150] sm:$0xff]
    %v930 = vld [vmem:[#allocation6 + $0x158] sm:$0x1]
    %v931 = vlaneseq
    %v932 = vshrl.u32 %v931, 7
    %v933 = vsub.s32 0, %v932
    %v934 = vrot.slane %v930, %v933
    %v936 = vsel %vm438, %v914, 0
    %v939 = vsel %vm438, %v915, 0
    %v942 = vsel %vm438, %v916, 0
    %v945 = vsel %vm438, %v917, 0
    %v948 = vsel %vm438, %v918, 0
    %v951 = vsel %vm438, %v919, 0
    %v954 = vsel %vm438, %v920, 0
    %v957 = vsel %vm438, %v921, 0
    %959 = vmatprep.subr.mxu0 0.0
    %960 = vmatpush1.msra.mxu0 %v922
    %961 = vmatprep.subr.mxu0 0.0
    %962 = vmatpush1.msra.mxu0 %v923
    %963 = vmatprep.subr.mxu0 0.0
    %964 = vmatpush1.msra.mxu0 %v924
    %965 = vmatprep.subr.mxu0 0.0
    %966 = vmatpush1.msra.mxu0 %v925
    %967 = vmatprep.subr.mxu0 0.0
    %968 = vmatpush1.msra.mxu0 %v926
    %969 = vmatprep.subr.mxu0 0.0
    %970 = vmatpush1.msra.mxu0 %v927
    %971 = vmatprep.subr.mxu0 0.0
    %972 = vmatpush1.msra.mxu0 %v928
    %973 = vmatprep.subr.mxu0 0.0
    %974 = vmatpush1.msra.mxu0 %v929
    %975 = vmatprep.subr.mxu0 0.0
    %976 = vmatpush1.msra.mxu0 0.0
    %977 = vmatprep.subr.mxu0 0.0
    %978 = vmatpush1.msra.mxu0 0.0
    %979 = vmatprep.subr.mxu0 0.0
    %980 = vmatpush1.msra.mxu0 0.0
    %981 = vmatprep.subr.mxu0 0.0
    %982 = vmatpush1.msra.mxu0 0.0
    %983 = vmatprep.subr.mxu0 0.0
    %984 = vmatpush1.msra.mxu0 0.0
    %985 = vmatprep.subr.mxu0 0.0
    %986 = vmatpush1.msra.mxu0 0.0
    %987 = vmatprep.subr.mxu0 0.0
    %988 = vmatpush1.msra.mxu0 0.0
    %989 = vmatprep.subr.mxu0 0.0
    %990 = vmatpush1.msra.mxu0 0.0
    %991 = vmatprep.subr.mxu0 0.0
    %992 = vmatpush1.msra.mxu0 0.0
    %993 = vmatprep.subr.mxu0 0.0
    %994 = vmatpush1.msra.mxu0 0.0
    %995 = vmatprep.subr.mxu0 0.0
    %996 = vmatpush1.msra.mxu0 0.0
    %997 = vmatprep.subr.mxu0 0.0
    %998 = vmatpush1.msra.mxu0 0.0
    %999 = vmatprep.subr.mxu0 0.0
    %1000 = vmatpush1.msra.mxu0 0.0
    %1001 = vmatprep.subr.mxu0 0.0
    %1002 = vmatpush1.msra.mxu0 0.0
    %1003 = vmatprep.subr.mxu0 0.0
    %1004 = vmatpush1.msra.mxu0 0.0
    %1005 = vmatprep.subr.mxu0 0.0
    %1006 = vmatpush1.msra.mxu0 0.0
    %1007 = vmatprep.subr.mxu0 0.0
    %1008 = vmatpush1.msra.mxu0 0.0
    %1009 = vmatprep.subr.mxu0 0.0
    %1010 = vmatpush1.msra.mxu0 0.0
    %1011 = vmatprep.subr.mxu0 0.0
    %1012 = vmatpush1.msra.mxu0 0.0
    %1013 = vmatprep.subr.mxu0 0.0
    %1014 = vmatpush1.msra.mxu0 0.0
    %1015 = vmatprep.subr.mxu0 0.0
    %1016 = vmatpush1.msra.mxu0 0.0
    %1017 = vmatprep.subr.mxu0 0.0
    %1018 = vmatpush1.msra.mxu0 0.0
    %1019 = vmatprep.subr.mxu0 0.0
    %1020 = vmatpush1.msra.mxu0 0.0
    %1021 = vmatprep.subr.mxu0 0.0
    %1022 = vmatpush1.msra.mxu0 0.0
    %1023 = vmatprep.mubr.f32.mxu0 0.0
    %1024 = vmatmul.mubr.f32.gmra.mrb[0].mxu0 %v936
    %v1025 = vpop.f32.mrb[0].mxu0
    %v1026 = vadd.f32 %v934, %v1025
    %v1027 = vpop.f32.mrb[0].mxu0
    %1028 = vmatprep.mubr.f32.mxu0 0.0
    %1029 = vmatmul.mubr.f32.gmra.mrb[0].mxu0 %v939
    %v1030 = vpop.f32.mrb[0].mxu0
    %v1031 = vadd.f32 %v934, %v1030
    %v1032 = vpop.f32.mrb[0].mxu0
    %1033 = vmatprep.mubr.f32.mxu0 0.0
    %1034 = vmatmul.mubr.f32.gmra.mrb[0].mxu0 %v942
    %v1035 = vpop.f32.mrb[0].mxu0
    %v1036 = vadd.f32 %v934, %v1035
    %v1037 = vpop.f32.mrb[0].mxu0
    %1038 = vmatprep.mubr.f32.mxu0 0.0
    %1039 = vmatmul.mubr.f32.gmra.mrb[0].mxu0 %v945
    %v1040 = vpop.f32.mrb[0].mxu0
    %v1041 = vadd.f32 %v934, %v1040
    %v1042 = vpop.f32.mrb[0].mxu0
    %1043 = vmatprep.mubr.f32.mxu0 0.0
    %1044 = vmatmul.mubr.f32.gmra.mrb[0].mxu0 %v948
    %v1045 = vpop.f32.mrb[0].mxu0
    %v1046 = vadd.f32 %v934, %v1045
    %v1047 = vpop.f32.mrb[0].mxu0
    %1048 = vmatprep.mubr.f32.mxu0 0.0
    %1049 = vmatmul.mubr.f32.gmra.mrb[0].mxu0 %v951
    %v1050 = vpop.f32.mrb[0].mxu0
    %v1051 = vadd.f32 %v934, %v1050
    %v1052 = vpop.f32.mrb[0].mxu0
    %1053 = vmatprep.mubr.f32.mxu0 0.0
    %1054 = vmatmul.mubr.f32.gmra.mrb[0].mxu0 %v954
    %v1055 = vpop.f32.mrb[0].mxu0
    %v1056 = vadd.f32 %v934, %v1055
    %v1057 = vpop.f32.mrb[0].mxu0
    %1058 = vmatprep.mubr.f32.mxu0 0.0
    %1059 = vmatmul.mubr.f32.gmra.mrb[0].mxu0 %v957
    %v1060 = vpop.f32.mrb[0].mxu0
    %v1061 = vadd.f32 %v934, %v1060
    %v1062 = vpop.f32.mrb[0].mxu0
    %1063 = vdwg.mxu0
    %v1064 = vxor.u32 %v1026, 2147483648
    %v1065 = vxor.u32 %v1031, 2147483648
    %v1066 = vxor.u32 %v1036, 2147483648
    %v1067 = vxor.u32 %v1041, 2147483648
    %v1068 = vxor.u32 %v1046, 2147483648
    %v1069 = vxor.u32 %v1051, 2147483648
    %v1070 = vxor.u32 %v1056, 2147483648
    %v1071 = vxor.u32 %v1061, 2147483648
    %v1072 = vmul.f32 %v1064, 1.442695
    %v1073 = vpow.pop %v1072
    %v1074 = vmul.f32 %v1065, 1.442695
    %v1075 = vpow.pop %v1074
    %v1076 = vmul.f32 %v1066, 1.442695
    %v1077 = vpow.pop %v1076
    %v1078 = vmul.f32 %v1067, 1.442695
    %v1079 = vpow.pop %v1078
    %v1080 = vmul.f32 %v1068, 1.442695
    %v1081 = vpow.pop %v1080
    %v1082 = vmul.f32 %v1069, 1.442695
    %v1083 = vpow.pop %v1082
    %v1084 = vmul.f32 %v1070, 1.442695
    %v1085 = vpow.pop %v1084
    %v1086 = vmul.f32 %v1071, 1.442695
    %v1087 = vpow.pop %v1086
    %v1088 = vadd.f32 %v1073, 1.0
    %v1089 = vadd.f32 %v1075, 1.0
    %v1090 = vadd.f32 %v1077, 1.0
    %v1091 = vadd.f32 %v1079, 1.0
    %v1092 = vadd.f32 %v1081, 1.0
    %v1093 = vadd.f32 %v1083, 1.0
    %v1094 = vadd.f32 %v1085, 1.0
    %v1095 = vadd.f32 %v1087, 1.0
    %v1096 = vrcp.pop %v1088
    %v1097 = vmul.f32 1.0, %v1096
    %v1098 = vrcp.pop %v1089
    %v1099 = vmul.f32 1.0, %v1098
    %v1100 = vrcp.pop %v1090
    %v1101 = vmul.f32 1.0, %v1100
    %v1102 = vrcp.pop %v1091
    %v1103 = vmul.f32 1.0, %v1102
    %v1104 = vrcp.pop %v1092
    %v1105 = vmul.f32 1.0, %v1104
    %v1106 = vrcp.pop %v1093
    %v1107 = vmul.f32 1.0, %v1106
    %v1108 = vrcp.pop %v1094
    %v1109 = vmul.f32 1.0, %v1108
    %v1110 = vrcp.pop %v1095
    %v1111 = vmul.f32 1.0, %v1110
    %vm1112 = vcmask 7168
    %1113 = vst.msk [vmem:[%s5] sm:$0xff] %vm1112, %v1097
    %1114 = vst.msk [vmem:[%s5 + $0x8] sm:$0xff] %vm1112, %v1099
    %1115 = vst.msk [vmem:[%s5 + $0x10] sm:$0xff] %vm1112, %v1101
    %1116 = vst.msk [vmem:[%s5 + $0x18] sm:$0xff] %vm1112, %v1103
    %1117 = vst.msk [vmem:[%s5 + $0x20] sm:$0xff] %vm1112, %v1105
    %1118 = vst.msk [vmem:[%s5 + $0x28] sm:$0xff] %vm1112, %v1107
    %1119 = vst.msk [vmem:[%s5 + $0x30] sm:$0xff] %vm1112, %v1109
    %1120 = vst.msk [vmem:[%s5 + $0x38] sm:$0xff] %vm1112, %v1111
    %v1121 = vmax.f32 %v393, %v397
    %v1122 = vmax.f32 %v394, %v398
    %v1123 = vmax.f32 %v395, %v399
    %v1124 = vmax.f32 %v396, %v400
    %v1125 = vmax.f32 %v1121, %v1123
    %v1126 = vmax.f32 %v1122, %v1124
    %v1127 = vmax.f32 %v1125, %v1126
    %v1128 = vld [vmem:[#allocation6 + $0x160] sm:$0xff]
    %v1129 = vld [vmem:[#allocation6 + $0x168] sm:$0xff]
    %v1130 = vld [vmem:[#allocation6 + $0x170] sm:$0xff]
    %v1131 = vld [vmem:[#allocation6 + $0x178] sm:$0xff]
    %v1132 = vld [vmem:[#allocation6 + $0x180] sm:$0x1]
    %v1133 = vlaneseq
    %v1134 = vshrl.u32 %v1133, 7
    %v1135 = vsub.s32 0, %v1134
    %v1136 = vrot.slane %v1132, %v1135
    %v1138 = vsel %vm245, %v1127, 0
    %1140 = vmatprep.subr.mxu0 0.0
    %1141 = vmatpush1.msra.mxu0 %v1128
    %1142 = vmatprep.subr.mxu0 0.0
    %1143 = vmatpush1.msra.mxu0 %v1129
    %1144 = vmatprep.subr.mxu0 0.0
    %1145 = vmatpush1.msra.mxu0 %v1130
    %1146 = vmatprep.subr.mxu0 0.0
    %1147 = vmatpush1.msra.mxu0 %v1131
    %1148 = vmatprep.subr.mxu0 0.0
    %1149 = vmatpush1.msra.mxu0 0.0
    %1150 = vmatprep.subr.mxu0 0.0
    %1151 = vmatpush1.msra.mxu0 0.0
    %1152 = vmatprep.subr.mxu0 0.0
    %1153 = vmatpush1.msra.mxu0 0.0
    %1154 = vmatprep.subr.mxu0 0.0
    %1155 = vmatpush1.msra.mxu0 0.0
    %1156 = vmatprep.subr.mxu0 0.0
    %1157 = vmatpush1.msra.mxu0 0.0
    %1158 = vmatprep.subr.mxu0 0.0
    %1159 = vmatpush1.msra.mxu0 0.0
    %1160 = vmatprep.subr.mxu0 0.0
    %1161 = vmatpush1.msra.mxu0 0.0
    %1162 = vmatprep.subr.mxu0 0.0
    %1163 = vmatpush1.msra.mxu0 0.0
    %1164 = vmatprep.subr.mxu0 0.0
    %1165 = vmatpush1.msra.mxu0 0.0
    %1166 = vmatprep.subr.mxu0 0.0
    %1167 = vmatpush1.msra.mxu0 0.0
    %1168 = vmatprep.subr.mxu0 0.0
    %1169 = vmatpush1.msra.mxu0 0.0
    %1170 = vmatprep.subr.mxu0 0.0
    %1171 = vmatpush1.msra.mxu0 0.0
    %1172 = vmatprep.subr.mxu0 0.0
    %1173 = vmatpush1.msra.mxu0 0.0
    %1174 = vmatprep.subr.mxu0 0.0
    %1175 = vmatpush1.msra.mxu0 0.0
    %1176 = vmatprep.subr.mxu0 0.0
    %1177 = vmatpush1.msra.mxu0 0.0
    %1178 = vmatprep.subr.mxu0 0.0
    %1179 = vmatpush1.msra.mxu0 0.0
    %1180 = vmatprep.subr.mxu0 0.0
    %1181 = vmatpush1.msra.mxu0 0.0
    %1182 = vmatprep.subr.mxu0 0.0
    %1183 = vmatpush1.msra.mxu0 0.0
    %1184 = vmatprep.subr.mxu0 0.0
    %1185 = vmatpush1.msra.mxu0 0.0
    %1186 = vmatprep.subr.mxu0 0.0
    %1187 = vmatpush1.msra.mxu0 0.0
    %1188 = vmatprep.subr.mxu0 0.0
    %1189 = vmatpush1.msra.mxu0 0.0
    %1190 = vmatprep.subr.mxu0 0.0
    %1191 = vmatpush1.msra.mxu0 0.0
    %1192 = vmatprep.subr.mxu0 0.0
    %1193 = vmatpush1.msra.mxu0 0.0
    %1194 = vmatprep.subr.mxu0 0.0
    %1195 = vmatpush1.msra.mxu0 0.0
    %1196 = vmatprep.subr.mxu0 0.0
    %1197 = vmatpush1.msra.mxu0 0.0
    %1198 = vmatprep.subr.mxu0 0.0
    %1199 = vmatpush1.msra.mxu0 0.0
    %1200 = vmatprep.subr.mxu0 0.0
    %1201 = vmatpush1.msra.mxu0 0.0
    %1202 = vmatprep.subr.mxu0 0.0
    %1203 = vmatpush1.msra.mxu0 0.0
    %1204 = vmatprep.mubr.f32.mxu0 0.0
    %1205 = vmatmul.mubr.f32.gmra.mrb[0].mxu0 %v1138
    %v1206 = vpop.f32.mrb[0].mxu0
    %v1207 = vadd.f32 %v1136, %v1206
    %v1208 = vpop.f32.mrb[0].mxu0
    %1209 = vdwg.mxu0
    %s1210 = sld [smem:[#allocation2 + $0x6]]
    %vm1211 = vcmp.gt.f32.partialorder %v1207, 0.0
    %v1212 = vstv %s1210
    %v1213 = vmul.f32 %v1212, %v1207
    %v1214 = vsel %vm1211, %v1207, %v1213
    %s1215 = sld [smem:[#allocation2 + $0xb]]
    %v1216 = vstv %s1215
    %v1217 = vmul.f32 %v1216, %v1207
    %v1218 = vsel %vm1211, %v1207, %v1217
    %v1219 = vld [vmem:[#allocation6 + $0x188] sm:$0xff]
    %v1220 = vld [vmem:[#allocation6 + $0x190] sm:$0xff]
    %v1221 = vld [vmem:[#allocation6 + $0x198] sm:$0xff]
    %v1222 = vld [vmem:[#allocation6 + $0x1a0] sm:$0xff]
    %v1223 = vld [vmem:[#allocation6 + $0x1a8] sm:$0xff]
    %v1224 = vld [vmem:[#allocation6 + $0x1b0] sm:$0xff]
    %v1225 = vld [vmem:[#allocation6 + $0x1b8] sm:$0xff]
    %v1226 = vld [vmem:[#allocation6 + $0x1c0] sm:$0xff]
    %v1227 = vld [vmem:[#allocation6 + $0x1c8] sm:$0x1]
    %v1228 = vlaneseq
    %v1229 = vshrl.u32 %v1228, 7
    %v1230 = vsub.s32 0, %v1229
    %v1231 = vrot.slane %v1227, %v1230
    %v1233 = vsel %vm438, %v1214, 0
    %1235 = vmatprep.subr.mxu0 0.0
    %1236 = vmatpush1.msra.mxu0 %v1219
    %1237 = vmatprep.subr.mxu0 0.0
    %1238 = vmatpush1.msra.mxu0 %v1220
    %1239 = vmatprep.subr.mxu0 0.0
    %1240 = vmatpush1.msra.mxu0 %v1221
    %1241 = vmatprep.subr.mxu0 0.0
    %1242 = vmatpush1.msra.mxu0 %v1222
    %1243 = vmatprep.subr.mxu0 0.0
    %1244 = vmatpush1.msra.mxu0 %v1223
    %1245 = vmatprep.subr.mxu0 0.0
    %1246 = vmatpush1.msra.mxu0 %v1224
    %1247 = vmatprep.subr.mxu0 0.0
    %1248 = vmatpush1.msra.mxu0 %v1225
    %1249 = vmatprep.subr.mxu0 0.0
    %1250 = vmatpush1.msra.mxu0 %v1226
    %1251 = vmatprep.subr.mxu0 0.0
    %1252 = vmatpush1.msra.mxu0 0.0
    %1253 = vmatprep.subr.mxu0 0.0
    %1254 = vmatpush1.msra.mxu0 0.0
    %1255 = vmatprep.subr.mxu0 0.0
    %1256 = vmatpush1.msra.mxu0 0.0
    %1257 = vmatprep.subr.mxu0 0.0
    %1258 = vmatpush1.msra.mxu0 0.0
    %1259 = vmatprep.subr.mxu0 0.0
    %1260 = vmatpush1.msra.mxu0 0.0
    %1261 = vmatprep.subr.mxu0 0.0
    %1262 = vmatpush1.msra.mxu0 0.0
    %1263 = vmatprep.subr.mxu0 0.0
    %1264 = vmatpush1.msra.mxu0 0.0
    %1265 = vmatprep.subr.mxu0 0.0
    %1266 = vmatpush1.msra.mxu0 0.0
    %1267 = vmatprep.subr.mxu0 0.0
    %1268 = vmatpush1.msra.mxu0 0.0
    %1269 = vmatprep.subr.mxu0 0.0
    %1270 = vmatpush1.msra.mxu0 0.0
    %1271 = vmatprep.subr.mxu0 0.0
    %1272 = vmatpush1.msra.mxu0 0.0
    %1273 = vmatprep.subr.mxu0 0.0
    %1274 = vmatpush1.msra.mxu0 0.0
    %1275 = vmatprep.subr.mxu0 0.0
    %1276 = vmatpush1.msra.mxu0 0.0
    %1277 = vmatprep.subr.mxu0 0.0
    %1278 = vmatpush1.msra.mxu0 0.0
    %1279 = vmatprep.subr.mxu0 0.0
    %1280 = vmatpush1.msra.mxu0 0.0
    %1281 = vmatprep.subr.mxu0 0.0
    %1282 = vmatpush1.msra.mxu0 0.0
    %1283 = vmatprep.subr.mxu0 0.0
    %1284 = vmatpush1.msra.mxu0 0.0
    %1285 = vmatprep.subr.mxu0 0.0
    %1286 = vmatpush1.msra.mxu0 0.0
    %1287 = vmatprep.subr.mxu0 0.0
    %1288 = vmatpush1.msra.mxu0 0.0
    %1289 = vmatprep.subr.mxu0 0.0
    %1290 = vmatpush1.msra.mxu0 0.0
    %1291 = vmatprep.subr.mxu0 0.0
    %1292 = vmatpush1.msra.mxu0 0.0
    %1293 = vmatprep.subr.mxu0 0.0
    %1294 = vmatpush1.msra.mxu0 0.0
    %1295 = vmatprep.subr.mxu0 0.0
    %1296 = vmatpush1.msra.mxu0 0.0
    %1297 = vmatprep.subr.mxu0 0.0
    %1298 = vmatpush1.msra.mxu0 0.0
    %1299 = vmatprep.mubr.f32.mxu0 0.0
    %1300 = vmatmul.mubr.f32.gmra.mrb[0].mxu0 %v1233
    %v1301 = vpop.f32.mrb[0].mxu0
    %v1302 = vadd.f32 %v1231, %v1301
    %v1303 = vpop.f32.mrb[0].mxu0
    %1304 = vdwg.mxu0
    %s1305 = sld [smem:[#allocation2 + $0x7]]
    %vm1306 = vcmp.gt.f32.partialorder %v1302, 0.0
    %v1307 = vstv %s1305
    %v1308 = vmul.f32 %v1307, %v1302
    %v1309 = vsel %vm1306, %v1302, %v1308
    %v1310 = vld [vmem:[#allocation6 + $0x1d0] sm:$0xff]
    %v1311 = vld [vmem:[#allocation6 + $0x1d8] sm:$0xff]
    %v1312 = vld [vmem:[#allocation6 + $0x1e0] sm:$0xff]
    %v1313 = vld [vmem:[#allocation6 + $0x1e8] sm:$0xff]
    %v1314 = vld [vmem:[#allocation6 + $0x1f0] sm:$0xff]
    %v1315 = vld [vmem:[#allocation6 + $0x1f8] sm:$0xff]
    %v1316 = vld [vmem:[#allocation6 + $0x200] sm:$0xff]
    %v1317 = vld [vmem:[#allocation6 + $0x208] sm:$0xff]
    %v1318 = vld [vmem:[#allocation6 + $0x210] sm:$0x1]
    %v1319 = vlaneseq
    %v1320 = vshrl.u32 %v1319, 7
    %v1321 = vsub.s32 0, %v1320
    %v1322 = vrot.slane %v1318, %v1321
    %v1324 = vsel %vm438, %v1309, 0
    %1326 = vmatprep.subr.mxu0 0.0
    %1327 = vmatpush1.msra.mxu0 %v1310
    %1328 = vmatprep.subr.mxu0 0.0
    %1329 = vmatpush1.msra.mxu0 %v1311
    %1330 = vmatprep.subr.mxu0 0.0
    %1331 = vmatpush1.msra.mxu0 %v1312
    %1332 = vmatprep.subr.mxu0 0.0
    %1333 = vmatpush1.msra.mxu0 %v1313
    %1334 = vmatprep.subr.mxu0 0.0
    %1335 = vmatpush1.msra.mxu0 %v1314
    %1336 = vmatprep.subr.mxu0 0.0
    %1337 = vmatpush1.msra.mxu0 %v1315
    %1338 = vmatprep.subr.mxu0 0.0
    %1339 = vmatpush1.msra.mxu0 %v1316
    %1340 = vmatprep.subr.mxu0 0.0
    %1341 = vmatpush1.msra.mxu0 %v1317
    %1342 = vmatprep.subr.mxu0 0.0
    %1343 = vmatpush1.msra.mxu0 0.0
    %1344 = vmatprep.subr.mxu0 0.0
    %1345 = vmatpush1.msra.mxu0 0.0
    %1346 = vmatprep.subr.mxu0 0.0
    %1347 = vmatpush1.msra.mxu0 0.0
    %1348 = vmatprep.subr.mxu0 0.0
    %1349 = vmatpush1.msra.mxu0 0.0
    %1350 = vmatprep.subr.mxu0 0.0
    %1351 = vmatpush1.msra.mxu0 0.0
    %1352 = vmatprep.subr.mxu0 0.0
    %1353 = vmatpush1.msra.mxu0 0.0
    %1354 = vmatprep.subr.mxu0 0.0
    %1355 = vmatpush1.msra.mxu0 0.0
    %1356 = vmatprep.subr.mxu0 0.0
    %1357 = vmatpush1.msra.mxu0 0.0
    %1358 = vmatprep.subr.mxu0 0.0
    %1359 = vmatpush1.msra.mxu0 0.0
    %1360 = vmatprep.subr.mxu0 0.0
    %1361 = vmatpush1.msra.mxu0 0.0
    %1362 = vmatprep.subr.mxu0 0.0
    %1363 = vmatpush1.msra.mxu0 0.0
    %1364 = vmatprep.subr.mxu0 0.0
    %1365 = vmatpush1.msra.mxu0 0.0
    %1366 = vmatprep.subr.mxu0 0.0
    %1367 = vmatpush1.msra.mxu0 0.0
    %1368 = vmatprep.subr.mxu0 0.0
    %1369 = vmatpush1.msra.mxu0 0.0
    %1370 = vmatprep.subr.mxu0 0.0
    %1371 = vmatpush1.msra.mxu0 0.0
    %1372 = vmatprep.subr.mxu0 0.0
    %1373 = vmatpush1.msra.mxu0 0.0
    %1374 = vmatprep.subr.mxu0 0.0
    %1375 = vmatpush1.msra.mxu0 0.0
    %1376 = vmatprep.subr.mxu0 0.0
    %1377 = vmatpush1.msra.mxu0 0.0
    %1378 = vmatprep.subr.mxu0 0.0
    %1379 = vmatpush1.msra.mxu0 0.0
    %1380 = vmatprep.subr.mxu0 0.0
    %1381 = vmatpush1.msra.mxu0 0.0
    %1382 = vmatprep.subr.mxu0 0.0
    %1383 = vmatpush1.msra.mxu0 0.0
    %1384 = vmatprep.subr.mxu0 0.0
    %1385 = vmatpush1.msra.mxu0 0.0
    %1386 = vmatprep.subr.mxu0 0.0
    %1387 = vmatpush1.msra.mxu0 0.0
    %1388 = vmatprep.subr.mxu0 0.0
    %1389 = vmatpush1.msra.mxu0 0.0
    %1390 = vmatprep.mubr.f32.mxu0 0.0
    %1391 = vmatmul.mubr.f32.gmra.mrb[0].mxu0 %v1324
    %v1392 = vpop.f32.mrb[0].mxu0
    %v1393 = vadd.f32 %v1322, %v1392
    %v1394 = vpop.f32.mrb[0].mxu0
    %1395 = vdwg.mxu0
    %s1396 = sld [smem:[#allocation2 + $0x8]]
    %vm1397 = vcmp.gt.f32.partialorder %v1393, 0.0
    %v1398 = vstv %s1396
    %v1399 = vmul.f32 %v1398, %v1393
    %v1400 = vsel %vm1397, %v1393, %v1399
    %v1401 = vld [vmem:[#allocation6 + $0x218] sm:$0xff]
    %v1402 = vld [vmem:[#allocation6 + $0x220] sm:$0xff]
    %v1403 = vld [vmem:[#allocation6 + $0x228] sm:$0xff]
    %v1404 = vld [vmem:[#allocation6 + $0x230] sm:$0xff]
    %v1405 = vld [vmem:[#allocation6 + $0x238] sm:$0xff]
    %v1406 = vld [vmem:[#allocation6 + $0x240] sm:$0xff]
    %v1407 = vld [vmem:[#allocation6 + $0x248] sm:$0xff]
    %v1408 = vld [vmem:[#allocation6 + $0x250] sm:$0xff]
    %v1409 = vld [vmem:[#allocation6 + $0x258] sm:$0x1]
    %v1410 = vlaneseq
    %v1411 = vshrl.u32 %v1410, 7
    %v1412 = vsub.s32 0, %v1411
    %v1413 = vrot.slane %v1409, %v1412
    %v1415 = vsel %vm438, %v1400, 0
    %1417 = vmatprep.subr.mxu0 0.0
    %1418 = vmatpush1.msra.mxu0 %v1401
    %1419 = vmatprep.subr.mxu0 0.0
    %1420 = vmatpush1.msra.mxu0 %v1402
    %1421 = vmatprep.subr.mxu0 0.0
    %1422 = vmatpush1.msra.mxu0 %v1403
    %1423 = vmatprep.subr.mxu0 0.0
    %1424 = vmatpush1.msra.mxu0 %v1404
    %1425 = vmatprep.subr.mxu0 0.0
    %1426 = vmatpush1.msra.mxu0 %v1405
    %1427 = vmatprep.subr.mxu0 0.0
    %1428 = vmatpush1.msra.mxu0 %v1406
    %1429 = vmatprep.subr.mxu0 0.0
    %1430 = vmatpush1.msra.mxu0 %v1407
    %1431 = vmatprep.subr.mxu0 0.0
    %1432 = vmatpush1.msra.mxu0 %v1408
    %1433 = vmatprep.subr.mxu0 0.0
    %1434 = vmatpush1.msra.mxu0 0.0
    %1435 = vmatprep.subr.mxu0 0.0
    %1436 = vmatpush1.msra.mxu0 0.0
    %1437 = vmatprep.subr.mxu0 0.0
    %1438 = vmatpush1.msra.mxu0 0.0
    %1439 = vmatprep.subr.mxu0 0.0
    %1440 = vmatpush1.msra.mxu0 0.0
    %1441 = vmatprep.subr.mxu0 0.0
    %1442 = vmatpush1.msra.mxu0 0.0
    %1443 = vmatprep.subr.mxu0 0.0
    %1444 = vmatpush1.msra.mxu0 0.0
    %1445 = vmatprep.subr.mxu0 0.0
    %1446 = vmatpush1.msra.mxu0 0.0
    %1447 = vmatprep.subr.mxu0 0.0
    %1448 = vmatpush1.msra.mxu0 0.0
    %1449 = vmatprep.subr.mxu0 0.0
    %1450 = vmatpush1.msra.mxu0 0.0
    %1451 = vmatprep.subr.mxu0 0.0
    %1452 = vmatpush1.msra.mxu0 0.0
    %1453 = vmatprep.subr.mxu0 0.0
    %1454 = vmatpush1.msra.mxu0 0.0
    %1455 = vmatprep.subr.mxu0 0.0
    %1456 = vmatpush1.msra.mxu0 0.0
    %1457 = vmatprep.subr.mxu0 0.0
    %1458 = vmatpush1.msra.mxu0 0.0
    %1459 = vmatprep.subr.mxu0 0.0
    %1460 = vmatpush1.msra.mxu0 0.0
    %1461 = vmatprep.subr.mxu0 0.0
    %1462 = vmatpush1.msra.mxu0 0.0
    %1463 = vmatprep.subr.mxu0 0.0
    %1464 = vmatpush1.msra.mxu0 0.0
    %1465 = vmatprep.subr.mxu0 0.0
    %1466 = vmatpush1.msra.mxu0 0.0
    %1467 = vmatprep.subr.mxu0 0.0
    %1468 = vmatpush1.msra.mxu0 0.0
    %1469 = vmatprep.subr.mxu0 0.0
    %1470 = vmatpush1.msra.mxu0 0.0
    %1471 = vmatprep.subr.mxu0 0.0
    %1472 = vmatpush1.msra.mxu0 0.0
    %1473 = vmatprep.subr.mxu0 0.0
    %1474 = vmatpush1.msra.mxu0 0.0
    %1475 = vmatprep.subr.mxu0 0.0
    %1476 = vmatpush1.msra.mxu0 0.0
    %1477 = vmatprep.subr.mxu0 0.0
    %1478 = vmatpush1.msra.mxu0 0.0
    %1479 = vmatprep.subr.mxu0 0.0
    %1480 = vmatpush1.msra.mxu0 0.0
    %1481 = vmatprep.mubr.f32.mxu0 0.0
    %1482 = vmatmul.mubr.f32.gmra.mrb[0].mxu0 %v1415
    %v1483 = vpop.f32.mrb[0].mxu0
    %v1484 = vadd.f32 %v1413, %v1483
    %v1485 = vpop.f32.mrb[0].mxu0
    %1486 = vdwg.mxu0
    %s1487 = sld [smem:[#allocation2 + $0x9]]
    %vm1488 = vcmp.gt.f32.partialorder %v1484, 0.0
    %v1489 = vstv %s1487
    %v1490 = vmul.f32 %v1489, %v1484
    %v1491 = vsel %vm1488, %v1484, %v1490
    %v1492 = vld [vmem:[#allocation6 + $0x260] sm:$0xff]
    %v1493 = vld [vmem:[#allocation6 + $0x268] sm:$0xff]
    %v1494 = vld [vmem:[#allocation6 + $0x270] sm:$0xff]
    %v1495 = vld [vmem:[#allocation6 + $0x278] sm:$0xff]
    %v1496 = vld [vmem:[#allocation6 + $0x280] sm:$0xff]
    %v1497 = vld [vmem:[#allocation6 + $0x288] sm:$0xff]
    %v1498 = vld [vmem:[#allocation6 + $0x290] sm:$0xff]
    %v1499 = vld [vmem:[#allocation6 + $0x298] sm:$0xff]
    %v1500 = vld [vmem:[#allocation6 + $0x2a0] sm:$0x1]
    %v1501 = vlaneseq
    %v1502 = vshrl.u32 %v1501, 7
    %v1503 = vsub.s32 0, %v1502
    %v1504 = vrot.slane %v1500, %v1503
    %v1506 = vsel %vm438, %v1491, 0
    %1508 = vmatprep.subr.mxu0 0.0
    %1509 = vmatpush1.msra.mxu0 %v1492
    %1510 = vmatprep.subr.mxu0 0.0
    %1511 = vmatpush1.msra.mxu0 %v1493
    %1512 = vmatprep.subr.mxu0 0.0
    %1513 = vmatpush1.msra.mxu0 %v1494
    %1514 = vmatprep.subr.mxu0 0.0
    %1515 = vmatpush1.msra.mxu0 %v1495
    %1516 = vmatprep.subr.mxu0 0.0
    %1517 = vmatpush1.msra.mxu0 %v1496
    %1518 = vmatprep.subr.mxu0 0.0
    %1519 = vmatpush1.msra.mxu0 %v1497
    %1520 = vmatprep.subr.mxu0 0.0
    %1521 = vmatpush1.msra.mxu0 %v1498
    %1522 = vmatprep.subr.mxu0 0.0
    %1523 = vmatpush1.msra.mxu0 %v1499
    %1524 = vmatprep.subr.mxu0 0.0
    %1525 = vmatpush1.msra.mxu0 0.0
    %1526 = vmatprep.subr.mxu0 0.0
    %1527 = vmatpush1.msra.mxu0 0.0
    %1528 = vmatprep.subr.mxu0 0.0
    %1529 = vmatpush1.msra.mxu0 0.0
    %1530 = vmatprep.subr.mxu0 0.0
    %1531 = vmatpush1.msra.mxu0 0.0
    %1532 = vmatprep.subr.mxu0 0.0
    %1533 = vmatpush1.msra.mxu0 0.0
    %1534 = vmatprep.subr.mxu0 0.0
    %1535 = vmatpush1.msra.mxu0 0.0
    %1536 = vmatprep.subr.mxu0 0.0
    %1537 = vmatpush1.msra.mxu0 0.0
    %1538 = vmatprep.subr.mxu0 0.0
    %1539 = vmatpush1.msra.mxu0 0.0
    %1540 = vmatprep.subr.mxu0 0.0
    %1541 = vmatpush1.msra.mxu0 0.0
    %1542 = vmatprep.subr.mxu0 0.0
    %1543 = vmatpush1.msra.mxu0 0.0
    %1544 = vmatprep.subr.mxu0 0.0
    %1545 = vmatpush1.msra.mxu0 0.0
    %1546 = vmatprep.subr.mxu0 0.0
    %1547 = vmatpush1.msra.mxu0 0.0
    %1548 = vmatprep.subr.mxu0 0.0
    %1549 = vmatpush1.msra.mxu0 0.0
    %1550 = vmatprep.subr.mxu0 0.0
    %1551 = vmatpush1.msra.mxu0 0.0
    %1552 = vmatprep.subr.mxu0 0.0
    %1553 = vmatpush1.msra.mxu0 0.0
    %1554 = vmatprep.subr.mxu0 0.0
    %1555 = vmatpush1.msra.mxu0 0.0
    %1556 = vmatprep.subr.mxu0 0.0
    %1557 = vmatpush1.msra.mxu0 0.0
    %1558 = vmatprep.subr.mxu0 0.0
    %1559 = vmatpush1.msra.mxu0 0.0
    %1560 = vmatprep.subr.mxu0 0.0
    %1561 = vmatpush1.msra.mxu0 0.0
    %1562 = vmatprep.subr.mxu0 0.0
    %1563 = vmatpush1.msra.mxu0 0.0
    %1564 = vmatprep.subr.mxu0 0.0
    %1565 = vmatpush1.msra.mxu0 0.0
    %1566 = vmatprep.subr.mxu0 0.0
    %1567 = vmatpush1.msra.mxu0 0.0
    %1568 = vmatprep.subr.mxu0 0.0
    %1569 = vmatpush1.msra.mxu0 0.0
    %1570 = vmatprep.subr.mxu0 0.0
    %1571 = vmatpush1.msra.mxu0 0.0
    %1572 = vmatprep.mubr.f32.mxu0 0.0
    %1573 = vmatmul.mubr.f32.gmra.mrb[0].mxu0 %v1506
    %v1574 = vpop.f32.mrb[0].mxu0
    %v1575 = vadd.f32 %v1504, %v1574
    %v1576 = vpop.f32.mrb[0].mxu0
    %1577 = vdwg.mxu0
    %s1578 = sld [smem:[#allocation2 + $0xa]]
    %vm1579 = vcmp.gt.f32.partialorder %v1575, 0.0
    %v1580 = vstv %s1578
    %v1581 = vmul.f32 %v1580, %v1575
    %v1582 = vsel %vm1579, %v1575, %v1581
    %v1583 = vld [vmem:[#allocation6 + $0x2a8] sm:$0xff]
    %v1584 = vld [vmem:[#allocation6 + $0x2b0] sm:$0xff]
    %v1585 = vld [vmem:[#allocation6 + $0x2b8] sm:$0xff]
    %v1586 = vld [vmem:[#allocation6 + $0x2c0] sm:$0xff]
    %v1587 = vld [vmem:[#allocation6 + $0x2c8] sm:$0xff]
    %v1588 = vld [vmem:[#allocation6 + $0x2d0] sm:$0xff]
    %v1589 = vld [vmem:[#allocation6 + $0x2d8] sm:$0xff]
    %v1590 = vld [vmem:[#allocation6 + $0x2e0] sm:$0xff]
    %v1591 = vld [vmem:[#allocation6 + $0x2e8] sm:$0x1]
    %v1592 = vlaneseq
    %v1593 = vshrl.u32 %v1592, 7
    %v1594 = vsub.s32 0, %v1593
    %v1595 = vrot.slane %v1591, %v1594
    %v1597 = vsel %vm438, %v1582, 0
    %1599 = vmatprep.subr.mxu0 0.0
    %1600 = vmatpush1.msra.mxu0 %v1583
    %1601 = vmatprep.subr.mxu0 0.0
    %1602 = vmatpush1.msra.mxu0 %v1584
    %1603 = vmatprep.subr.mxu0 0.0
    %1604 = vmatpush1.msra.mxu0 %v1585
    %1605 = vmatprep.subr.mxu0 0.0
    %1606 = vmatpush1.msra.mxu0 %v1586
    %1607 = vmatprep.subr.mxu0 0.0
    %1608 = vmatpush1.msra.mxu0 %v1587
    %1609 = vmatprep.subr.mxu0 0.0
    %1610 = vmatpush1.msra.mxu0 %v1588
    %1611 = vmatprep.subr.mxu0 0.0
    %1612 = vmatpush1.msra.mxu0 %v1589
    %1613 = vmatprep.subr.mxu0 0.0
    %1614 = vmatpush1.msra.mxu0 %v1590
    %1615 = vmatprep.subr.mxu0 0.0
    %1616 = vmatpush1.msra.mxu0 0.0
    %1617 = vmatprep.subr.mxu0 0.0
    %1618 = vmatpush1.msra.mxu0 0.0
    %1619 = vmatprep.subr.mxu0 0.0
    %1620 = vmatpush1.msra.mxu0 0.0
    %1621 = vmatprep.subr.mxu0 0.0
    %1622 = vmatpush1.msra.mxu0 0.0
    %1623 = vmatprep.subr.mxu0 0.0
    %1624 = vmatpush1.msra.mxu0 0.0
    %1625 = vmatprep.subr.mxu0 0.0
    %1626 = vmatpush1.msra.mxu0 0.0
    %1627 = vmatprep.subr.mxu0 0.0
    %1628 = vmatpush1.msra.mxu0 0.0
    %1629 = vmatprep.subr.mxu0 0.0
    %1630 = vmatpush1.msra.mxu0 0.0
    %1631 = vmatprep.subr.mxu0 0.0
    %1632 = vmatpush1.msra.mxu0 0.0
    %1633 = vmatprep.subr.mxu0 0.0
    %1634 = vmatpush1.msra.mxu0 0.0
    %1635 = vmatprep.subr.mxu0 0.0
    %1636 = vmatpush1.msra.mxu0 0.0
    %1637 = vmatprep.subr.mxu0 0.0
    %1638 = vmatpush1.msra.mxu0 0.0
    %1639 = vmatprep.subr.mxu0 0.0
    %1640 = vmatpush1.msra.mxu0 0.0
    %1641 = vmatprep.subr.mxu0 0.0
    %1642 = vmatpush1.msra.mxu0 0.0
    %1643 = vmatprep.subr.mxu0 0.0
    %1644 = vmatpush1.msra.mxu0 0.0
    %1645 = vmatprep.subr.mxu0 0.0
    %1646 = vmatpush1.msra.mxu0 0.0
    %1647 = vmatprep.subr.mxu0 0.0
    %1648 = vmatpush1.msra.mxu0 0.0
    %1649 = vmatprep.subr.mxu0 0.0
    %1650 = vmatpush1.msra.mxu0 0.0
    %1651 = vmatprep.subr.mxu0 0.0
    %1652 = vmatpush1.msra.mxu0 0.0
    %1653 = vmatprep.subr.mxu0 0.0
    %1654 = vmatpush1.msra.mxu0 0.0
    %1655 = vmatprep.subr.mxu0 0.0
    %1656 = vmatpush1.msra.mxu0 0.0
    %1657 = vmatprep.subr.mxu0 0.0
    %1658 = vmatpush1.msra.mxu0 0.0
    %1659 = vmatprep.subr.mxu0 0.0
    %1660 = vmatpush1.msra.mxu0 0.0
    %1661 = vmatprep.subr.mxu0 0.0
    %1662 = vmatpush1.msra.mxu0 0.0
    %1663 = vmatprep.mubr.f32.mxu0 0.0
    %1664 = vmatmul.mubr.f32.gmra.mrb[0].mxu0 %v1597
    %v1665 = vpop.f32.mrb[0].mxu0
    %v1666 = vadd.f32 %v1595, %v1665
    %v1667 = vpop.f32.mrb[0].mxu0
    %1668 = vdwg.mxu0
    %v1669 = vmax.f32 %v1666, 0.0
    %v1670 = vadd.f32 %v1669, 0.7853982
    %v1671 = vtanh.pop %v1666
    %v1672 = vmul.f32 %v1671, 3.1415927
    %v1673 = vld [vmem:[#allocation6 + $0x2f0] sm:$0xff]
    %v1674 = vld [vmem:[#allocation6 + $0x2f8] sm:$0xff]
    %v1675 = vld [vmem:[#allocation6 + $0x300] sm:$0xff]
    %v1676 = vld [vmem:[#allocation6 + $0x308] sm:$0xff]
    %v1677 = vld [vmem:[#allocation6 + $0x310] sm:$0x1]
    %v1678 = vlaneseq
    %v1679 = vshrl.u32 %v1678, 7
    %v1680 = vsub.s32 0, %v1679
    %v1681 = vrot.slane %v1677, %v1680
    %1683 = vrot.lane.b32.xlu0 %v1218, 64
    %v1684 = vpop.permute.xlu0 %1683
    %v1685 = vsel %vm245, %v1684, 0
    %1687 = vmatprep.subr.mxu0 0.0
    %1688 = vmatpush1.msra.mxu0 %v1673
    %1689 = vmatprep.subr.mxu0 0.0
    %1690 = vmatpush1.msra.mxu0 %v1674
    %1691 = vmatprep.subr.mxu0 0.0
    %1692 = vmatpush1.msra.mxu0 %v1675
    %1693 = vmatprep.subr.mxu0 0.0
    %1694 = vmatpush1.msra.mxu0 %v1676
    %1695 = vmatprep.subr.mxu0 0.0
    %1696 = vmatpush1.msra.mxu0 0.0
    %1697 = vmatprep.subr.mxu0 0.0
    %1698 = vmatpush1.msra.mxu0 0.0
    %1699 = vmatprep.subr.mxu0 0.0
    %1700 = vmatpush1.msra.mxu0 0.0
    %1701 = vmatprep.subr.mxu0 0.0
    %1702 = vmatpush1.msra.mxu0 0.0
    %1703 = vmatprep.subr.mxu0 0.0
    %1704 = vmatpush1.msra.mxu0 0.0
    %1705 = vmatprep.subr.mxu0 0.0
    %1706 = vmatpush1.msra.mxu0 0.0
    %1707 = vmatprep.subr.mxu0 0.0
    %1708 = vmatpush1.msra.mxu0 0.0
    %1709 = vmatprep.subr.mxu0 0.0
    %1710 = vmatpush1.msra.mxu0 0.0
    %1711 = vmatprep.subr.mxu0 0.0
    %1712 = vmatpush1.msra.mxu0 0.0
    %1713 = vmatprep.subr.mxu0 0.0
    %1714 = vmatpush1.msra.mxu0 0.0
    %1715 = vmatprep.subr.mxu0 0.0
    %1716 = vmatpush1.msra.mxu0 0.0
    %1717 = vmatprep.subr.mxu0 0.0
    %1718 = vmatpush1.msra.mxu0 0.0
    %1719 = vmatprep.subr.mxu0 0.0
    %1720 = vmatpush1.msra.mxu0 0.0
    %1721 = vmatprep.subr.mxu0 0.0
    %1722 = vmatpush1.msra.mxu0 0.0
    %1723 = vmatprep.subr.mxu0 0.0
    %1724 = vmatpush1.msra.mxu0 0.0
    %1725 = vmatprep.subr.mxu0 0.0
    %1726 = vmatpush1.msra.mxu0 0.0
    %1727 = vmatprep.subr.mxu0 0.0
    %1728 = vmatpush1.msra.mxu0 0.0
    %1729 = vmatprep.subr.mxu0 0.0
    %1730 = vmatpush1.msra.mxu0 0.0
    %1731 = vmatprep.subr.mxu0 0.0
    %1732 = vmatpush1.msra.mxu0 0.0
    %1733 = vmatprep.subr.mxu0 0.0
    %1734 = vmatpush1.msra.mxu0 0.0
    %1735 = vmatprep.subr.mxu0 0.0
    %1736 = vmatpush1.msra.mxu0 0.0
    %1737 = vmatprep.subr.mxu0 0.0
    %1738 = vmatpush1.msra.mxu0 0.0
    %1739 = vmatprep.subr.mxu0 0.0
    %1740 = vmatpush1.msra.mxu0 0.0
    %1741 = vmatprep.subr.mxu0 0.0
    %1742 = vmatpush1.msra.mxu0 0.0
    %1743 = vmatprep.subr.mxu0 0.0
    %1744 = vmatpush1.msra.mxu0 0.0
    %1745 = vmatprep.subr.mxu0 0.0
    %1746 = vmatpush1.msra.mxu0 0.0
    %1747 = vmatprep.subr.mxu0 0.0
    %1748 = vmatpush1.msra.mxu0 0.0
    %1749 = vmatprep.subr.mxu0 0.0
    %1750 = vmatpush1.msra.mxu0 0.0
    %1751 = vmatprep.mubr.f32.mxu0 0.0
    %1752 = vmatmul.mubr.f32.gmra.mrb[0].mxu0 %v1685
    %v1753 = vpop.f32.mrb[0].mxu0
    %v1754 = vadd.f32 %v1681, %v1753
    %v1755 = vpop.f32.mrb[0].mxu0
    %1756 = vdwg.mxu0
    %v1757 = vxor.u32 %v1754, 2147483648
    %v1758 = vmul.f32 %v1757, 1.442695
    %v1759 = vpow.pop %v1758
    %v1760 = vadd.f32 %v1759, 1.0
    %v1761 = vrcp.pop %v1760
    %v1762 = vmul.f32 1.0, %v1761
    %v1763 = vmul.f32 %v1762, 8.0
    %v1764 = vld [vmem:[%s1] sm:$0xff]
    %1766 = vset.pattern.permute.xlu0 0
    %1767 = vperm.xlu0 %1766, %v1670
    %v1768 = vpop.permute.xlu0 %1767
    %v1770 = vmul.f32 %v1768, %v1764
    %1772 = vset.pattern.permute.xlu0 1
    %1773 = vperm.xlu0 %1772, %v1672
    %v1774 = vpop.permute.xlu0 %1773
    %v1776 = vadd.f32 %v1770, %v1774
    %v1777 = vand.u32 2147483647, %v1776
    %vm1778 = vcmp.le.f32.partialorder %v1777, 0.7853982
    %vm1779 = vcmp.lt.s32.totalorder %v1776, 0
    %v1780 = vand.u32 %v1776, 2139095040
    %v1781 = vshrl.u32 %v1780, 23
    %v1782 = vsub.s32 %v1781, 127
    %v1783 = vand.u32 2147483647, %v1776
    %v1784 = vand.u32 %v1783, 8388607
    %v1785 = vor.u32 %v1784, 8388608
    %v1786 = vsub.s32 0, %v1785
    %v1787 = vadd.s32 %v1782, 1
    %vm1788 = vcmp.gt.s32.totalorder %v1787, 0
    %v1789 = vsel %vm1788, %v1787, 0
    %v1790 = vshrl.u32 %v1789, 5
    %v1791 = vand.u32 %v1789, 31
    %v1792 = vsub.s32 32, %v1791
    %v1793 = vshrl.u32 683565275, %v1792
    %v1794 = vshll.u32 683565275, %v1791
    %v1795 = vshrl.u32 2475754826, %v1792
    %v1796 = vor.u32 %v1794, %v1795
    %v1797 = vshll.u32 2475754826, %v1791
    %v1798 = vshrl.u32 2131351028, %v1792
    %v1799 = vor.u32 %v1797, %v1798
    %v1800 = vshll.u32 2131351028, %v1791
    %v1801 = vshrl.u32 2102212464, %v1792
    %v1802 = vor.u32 %v1800, %v1801
    %v1803 = vshll.u32 2102212464, %v1791
    %v1804 = vshrl.u32 920167782, %v1792
    %v1805 = vor.u32 %v1803, %v1804
    %v1806 = vshll.u32 920167782, %v1791
    %v1807 = vshrl.u32 1326507024, %v1792
    %v1808 = vor.u32 %v1806, %v1807
    %vm1809 = vcmp.lt.s32.totalorder %v1790, 1
    %vm1810 = vcmp.lt.s32.totalorder %v1790, 2
    %vm1811 = vcmp.lt.s32.totalorder %v1790, 3
    %vm1812 = vcmp.lt.s32.totalorder %v1790, 4
    %v1813 = vsel %vm1809, %v1793, %v1796
    %v1814 = vsel %vm1812, %v1802, 2102212464
    %v1815 = vsel %vm1811, %v1799, %v1814
    %v1816 = vsel %vm1810, %v1813, %v1815
    %v1817 = vsel %vm1809, %v1796, %v1799
    %v1818 = vsel %vm1812, %v1805, 920167782
    %v1819 = vsel %vm1811, %v1802, %v1818
    %v1820 = vsel %vm1810, %v1817, %v1819
    %v1821 = vsel %vm1809, %v1799, %v1802
    %v1822 = vsel %vm1812, %v1808, 1326507024
    %v1823 = vsel %vm1811, %v1805, %v1822
    %v1824 = vsel %vm1810, %v1821, %v1823
    %v1825 = vshll.u32 %v1785, 8
    %v1826 = vmul.u32.u64.compose %v1825, %v1824
    %v1827 = vextract.low.u32 %v1826
    %v1828 = vextract.high.u32 %v1826
    %v1829 = vmul.u32.u64.compose %v1825, %v1820
    %v1830 = vextract.low.u32 %v1829
    %v1831 = vextract.high.u32 %v1829
    %v1832 = vmul.u32 %v1825, %v1816
    %v1833 = vadd.s32 %v1828, %v1830
    %vm1834 = vc.u32 %v1828, %v1830
    %v1835 = vadd.s32 %v1831, 1
    %v1836 = vsel %vm1834, %v1835, %v1831
    %v1837 = vadd.s32 %v1832, %v1836
    %v1838 = vadd.s32 %v1837, 536870912
    %v1839 = vshrl.u32 %v1838, 30
    %v1840 = vshll.u32 %v1839, 30
    %v1841 = vsub.s32 %v1837, %v1840
    %vm1842 = vcmp.lt.s32.totalorder %v1841, 0
    %v1843 = vsub.s32 0, %v1841
    %v1844 = vsel %vm1842, %v1843, %v1841
    %v1845 = vclz %v1844
    %v1846 = vsub.s32 %v1845, 2
    %vm1847 = vcmp.gt.s32.totalorder 0, %v1846
    %v1848 = vsel %vm1847, 0, %v1846
    %v1849 = vsub.s32 32, %v1848
    %v1850 = vshll.u32 %v1841, %v1848
    %v1851 = vshrl.u32 %v1833, %v1849
    %v1852 = vor.u32 %v1850, %v1851
    %v1853 = vsub.s32 4294967266, %v1848
    %v1854 = vadd.s32 %v1853, 127
    %v1855 = vshll.u32 %v1854, 23
    %v1856 = vor.u32 4788187, %v1855
    %v1857 = vand.u32 2147483647, %v1856
    %v1859 = vcvt.s32.f32 %v1852
    %v1860 = vmul.f32 %v1859, %v1857
    %v1861 = vxor.u32 %v1860, 2147483648
    %v1862 = vsel %vm1779, %v1861, %v1860
    %v1863 = vsub.s32 4, %v1839
    %v1864 = vsel %vm1779, %v1863, %v1839
    %v1865 = vsel %vm1778, %v1776, %v1862
    %v1866 = vsel %vm1778, 0, %v1864
    %v1867 = vcosq.f32.pop %v1865
    %v1868 = vsinq.f32.pop %v1865
    %vm1869 = vweird.f32 %v1776
    %v1870 = vadd.s32 %v1866, 3
    %v1871 = vand.u32 %v1870, 3
    %vm1872 = vcmp.lt.s32.totalorder %v1871, 2
    %vm1873 = vcmp.eq.s32.totalorder %v1871, 0
    %v1874 = vxor.u32 %v1868, 2147483648
    %v1875 = vsel %vm1873, %v1867, %v1874
    %vm1876 = vcmp.eq.s32.totalorder %v1871, 2
    %v1877 = vxor.u32 %v1867, 2147483648
    %v1878 = vsel %vm1876, %v1877, %v1868
    %v1879 = vsel %vm1872, %v1875, %v1878
    %v1880 = vsel %vm1869, nan, %v1879
    %1882 = vset.pattern.permute.xlu0 2
    %1883 = vperm.xlu0 %1882, %v1671
    %v1884 = vpop.permute.xlu0 %1883
    %v1886 = vsub.f32 %v1880, %v1884
    %v1887 = vmul.f32 %v1886, 0.25
    %v1888 = vadd.f32 %v1887, 0.5
    %vm1889 = vcmp.gt.f32.partialorder %v1888, 0.5
    %v1890 = vsel %vm1889, 1, 0
    %v1891 = vcvt.s32.f32 %v1890
    %1892 = vrot.lane.b32.xlu0 %v1670, 8
    %v1893 = vpop.permute.xlu0 %1892
    %1895 = vrot.lane.b32.xlu0 %v1672, 8
    %v1896 = vpop.permute.xlu0 %1895
    %1898 = vrot.lane.b32.xlu0 %v1671, 8
    %v1899 = vpop.permute.xlu0 %1898
    %1902 = vrot.lane.b32.xlu0 %v1763, 11
    %v1903 = vpop.permute.xlu0 %1902
    %vm1905 = vcmask 64512
    %v1906 = vsel %vm1905, %v1891, %v1893
    %vm1907 = vcmask 72704
    %v1908 = vsel %vm1907, %v1906, %v1896
    %vm1909 = vcmask 80896
    %v1910 = vsel %vm1909, %v1908, %v1899
    %vm1911 = vcmask 89088
    %v1912 = vsel %vm1911, %v1910, %v1903
    %vm1913 = vcmask 97280
    %1914 = vst.msk [vmem:[#allocation7] sm:$0xff] %vm1913, %v1912
    // Predicated region
    $region26: #{tpu_custom_call.1} parent=1 // pred_check
      _
    $region27: #{tpu_custom_call.1} parent=1 // pred_check_branch
      %1916 = sbr.rel (0) target = $region29
    $region28: #{tpu_custom_call.1} parent=1 // pred_region
      %s1918 = ssub.s32 128, 128
      %1919 = vsyncadd [#allocation4], %s1918
      %s1921 = sshll.u32 [#allocation7], 4
      %s1922 = int_to_ptr.vmem [resolvable:$true] %s1921
      %1924 = dma.vmem_to_hbm [thread:$0]  %s1922, 128, %s4, [#allocation4]
    $region29: #{tpu_custom_call.1} parent=1 // pred_fallthru
      _
    // Predicated region
    $region30: #{tpu_custom_call.1} parent=1 // pred_check
      _
    $region31: #{tpu_custom_call.1} parent=1 // pred_check_branch
      %1926 = sbr.rel (0) target = $region33
    $region32: #{tpu_custom_call.1} parent=1 // pred_region
      _
    $region33: #{tpu_custom_call.1} parent=1 // pred_fallthru
      _
    // Predicated region
    $region34: #{tpu_custom_call.1} parent=1 // pred_check
      _
    $region35: #{tpu_custom_call.1} parent=1 // pred_check_branch
      %1928 = sbr.rel (0) target = $region37
    $region36: #{tpu_custom_call.1} parent=1 // pred_region
      %1929 = dma.done [#allocation4], 128
    $region37: #{tpu_custom_call.1} parent=1 // pred_fallthru
      _
    // Predicated region
    $region38: #{tpu_custom_call.1} parent=1 // pred_check
      _
    $region39: #{tpu_custom_call.1} parent=1 // pred_check_branch
      %1931 = sbr.rel (0) target = $region41
    $region40: #{tpu_custom_call.1} parent=1 // pred_region
      _
    $region41: #{tpu_custom_call.1} parent=1 // pred_fallthru
      _
    %1932 = vsyncpa [#allocation3], 1
    %1933 = vsyncpa [#allocation4], 1
    %1934 = vsyncpa [#allocation5], 1

</llo_original>
